<compile_context>
chip_gen: v7x
topology: tpu7x:2x2x1
jax: 0.10.0
libtpu: 0.0.40
codegen_flags: <defaults>
</compile_context>

<pallas_src>
import jax
import jax.numpy as jnp
from jax.experimental import pallas as pl
from jax.experimental.pallas import tpu as pltpu

EPS_GN = 1e-3
EPS_BN = 1e-3


# ----------------------------- activation helpers -----------------------------
def _softplus(x):
    return jnp.maximum(x, 0.0) + jnp.log(1.0 + jnp.exp(-jnp.abs(x)))


def _mish_ref(x):
    # canonical mish, used by the pure-JAX reference
    return x * jnp.tanh(_softplus(x))


def _mish(x):
    # mish(x) = x * tanh(softplus(x)) = x * (u^2 - 1) / (u^2 + 1),  u = 1+exp(x)
    # Clamp the exponent so u^2 cannot overflow; at x = 20 the factor equals 1.0
    # to f32 precision, so the clamp does not change the result.
    u = 1.0 + jnp.exp(jnp.minimum(x, 20.0))
    u2 = u * u
    return x * (u2 - 1.0) / (u2 + 1.0)


def _gn_affine_mish(y, gmat, gamma, beta):
    # One-pass GroupNorm + per-channel affine + Mish on a [Ch, HW] block.
    # gmat is [Ch, Ch] with 1/(group_size*HW) for same-group entries, so
    # gmat @ row_sum gives the per-channel group mean directly (no concat).
    rs = jnp.sum(y, axis=1, keepdims=True)            # [Ch, 1]
    rq = jnp.sum(y * y, axis=1, keepdims=True)        # [Ch, 1]
    mean = jnp.dot(gmat, rs, preferred_element_type=jnp.float32)
    ex2 = jnp.dot(gmat, rq, preferred_element_type=jnp.float32)
    var = jnp.maximum(ex2 - mean * mean, 0.0)
    scale = gamma * jax.lax.rsqrt(var + EPS_GN)
    bias = beta - mean * scale
    return _mish(y * scale + bias)


# ------------------------------- fused kernel ---------------------------------
def _make_fused_kernel(H, W, C, r):
    HW = H * W

    def kernel(x_ref, w1t_ref, gm1_ref, gn1g_ref, gn1b_ref,
               w3im_ref, gm3_ref, gn3g_ref, gn3b_ref, wmask_ref,
               wd1t_ref, bd1_ref, bng_ref, bnb_ref, bnm_ref, bnv_ref,
               wd2t_ref, bd2_ref, o_ref):
        x = x_ref[0]                                          # [C, HW] f32

        # ---- conv1: grouped 1x1 as one block-diagonal matmul, + GN + Mish ----
        y1 = jnp.dot(w1t_ref[...], x, preferred_element_type=jnp.float32)
        y1 = _gn_affine_mish(y1, gm1_ref[...], gn1g_ref[...], gn1b_ref[...])

        # ---- conv3: grouped 3x3 "same" conv as one im2col matmul, + GN + Mish
        # Zero-pad the flattened spatial axis by W+1 on each side; a tap
        # (kh, kw) is then the slice starting at (W+1) + (kh-1)*W + (kw-1).
        # Horizontal boundary wrap is killed by the precomputed column masks.
        zpad = jnp.zeros((C, W + 1), jnp.float32)
        y1pad = jnp.concatenate([zpad, y1, zpad], axis=1)     # [C, HW + 2W + 2]
        taps = []
        for kh in range(3):
            for kw in range(3):
                s = (kh - 1) * W + (kw - 1)
                xs = y1pad[:, (W + 1) + s:(W + 1) + s + HW]   # [C, HW]
                if kw != 1:
                    xs = xs * wmask_ref[kw:kw + 1, :]
                taps.append(xs)
        xcol = jnp.concatenate(taps, axis=0)                  # [9*C, HW]
        y3 = jnp.dot(w3im_ref[...], xcol, preferred_element_type=jnp.float32)
        y3 = _gn_affine_mish(y3, gm3_ref[...], gn3g_ref[...], gn3b_ref[...])

        # ---- split attention -------------------------------------------------
        added = y3[0:C, :]
        for i in range(1, r):
            added = added + y3[i * C:(i + 1) * C, :]
        pooled = jnp.sum(added, axis=1, keepdims=True) * (1.0 / HW)   # [C, 1]

        # dense1 (1x1 conv + BatchNorm(inference) + Mish), column-oriented
        d1 = jnp.dot(wd1t_ref[...], pooled,
                     preferred_element_type=jnp.float32) + bd1_ref[...]
        d1 = (d1 - bnm_ref[...]) * jax.lax.rsqrt(bnv_ref[...] + EPS_BN)
        d1 = _mish(d1 * bng_ref[...] + bnb_ref[...])          # [inner, 1]

        # dense2 (grouped 1x1) as one block-diagonal matmul
        d2 = jnp.dot(wd2t_ref[...], d1,
                     preferred_element_type=jnp.float32) + bd2_ref[...]  # [C*r,1]

        out = jnp.zeros((C, HW), jnp.float32)
        for i in range(r):
            di = d2[i * C:(i + 1) * C, :]                     # [C, 1]
            e = jnp.exp(di - jnp.max(di))
            attn = e / jnp.sum(e)                             # softmax over C
            out = out + attn * y3[i * C:(i + 1) * C, :]
        o_ref[0] = out.astype(o_ref.dtype)

    return kernel


# ------------------------- wrapper + weight packing ---------------------------
def _pack_params(params, C, r, H, W):
    cg = C // r
    Cr = C * r
    HW = H * W
    inner = params["wd1"].shape[1]
    ig = inner // r

    def col(a):
        return jnp.asarray(a, jnp.float32).reshape(-1, 1)

    # conv1 weight -> block-diagonal [C_out, C_in]
    w1t = jnp.zeros((C, C), jnp.float32)
    for g in range(r):
        w1t = w1t.at[g * cg:(g + 1) * cg, g * cg:(g + 1) * cg].set(
            params["w1"][g].T)

    # conv3 weight -> im2col block matrix [C*r, 9*C]
    w3im = jnp.zeros((Cr, 9 * C), jnp.float32)
    for g in range(r):
        for kh in range(3):
            for kw in range(3):
                k = kh * 3 + kw
                w3im = w3im.at[g * C:(g + 1) * C,
                               k * C + g * cg:k * C + (g + 1) * cg].set(
                    params["w3"][g, kh, kw].T)

    # dense2 weight -> block-diagonal [C*r, inner]
    wd2t = jnp.zeros((Cr, inner), jnp.float32)
    for i in range(r):
        wd2t = wd2t.at[i * C:(i + 1) * C, i * ig:(i + 1) * ig].set(
            params["wd2"][i].T)

    # group-mean matrices (fold the 1/(group_size*HW) normalization in)
    def gmat(channels, groups):
        gs = channels // groups
        gid = jnp.arange(channels) // gs
        same = (gid[:, None] == gid[None, :]).astype(jnp.float32)
        return same / float(gs * HW)

    # horizontal-boundary masks for the three kw taps of the 3x3 conv
    wpos = jnp.arange(HW) % W
    wmask = jnp.stack([
        (wpos != 0).astype(jnp.float32),
        jnp.ones((HW,), jnp.float32),
        (wpos != W - 1).astype(jnp.float32)], axis=0)         # [3, HW]

    return [
        w1t, gmat(C, r), col(params["gn1_gamma"]), col(params["gn1_beta"]),
        w3im, gmat(Cr, r), col(params["gn3_gamma"]), col(params["gn3_beta"]),
        wmask,
        jnp.asarray(params["wd1"], jnp.float32).T, col(params["bd1"]),
        col(params["bn_gamma"]), col(params["bn_beta"]),
        col(params["bn_mean"]), col(params["bn_var"]),
        wd2t, col(params["bd2"]),
    ]


def cardinal_block_forward(x_nchw, params, r):
    N, C, H, W = x_nchw.shape
    HW = H * W
    x = jnp.asarray(x_nchw, jnp.float32).reshape(N, C, HW)    # [N, C, HW]
    packed = _pack_params(params, C, r, H, W)

    def pspec(a):
        nd = a.ndim
        return pl.BlockSpec(a.shape, lambda n, _nd=nd: (0,) * _nd)

    kernel = _make_fused_kernel(H, W, C, r)
    out = pl.pallas_call(
        kernel,
        out_shape=jax.ShapeDtypeStruct((N, C, HW), jnp.float32),
        grid=(N,),
        in_specs=[pl.BlockSpec((1, C, HW), lambda n: (n, 0, 0))]
                 + [pspec(a) for a in packed],
        out_specs=pl.BlockSpec((1, C, HW), lambda n: (n, 0, 0)),
        compiler_params=pltpu.CompilerParams(
            dimension_semantics=("parallel",)),
    )(x, *packed)
    return out.reshape(N, C, H, W)                            # NCHW, no transpose


# -------------------- pure-JAX reference (for a sanity check) ------------------
def reference_forward(x_nchw, params, r):
    x = jnp.transpose(x_nchw, (0, 2, 3, 1)).astype(jnp.float32)
    N, H, W, C = x.shape
    cg = C // r
    hi = jax.lax.Precision.HIGHEST

    def gn(v, gamma, beta, groups):
        Ch = v.shape[-1]
        gs = Ch // groups
        vr = v.reshape(N, H, W, groups, gs)
        mean = jnp.mean(vr, axis=(1, 2, 4), keepdims=True)
        var = jnp.mean((vr - mean) ** 2, axis=(1, 2, 4), keepdims=True)
        vr = (vr - mean) * jax.lax.rsqrt(var + EPS_GN)
        v = vr.reshape(N, H, W, Ch)
        return v * gamma.reshape(1, 1, 1, Ch) + beta.reshape(1, 1, 1, Ch)

    # conv1
    y1 = jnp.concatenate(
        [jnp.einsum("nhwi,io->nhwo", x[..., g * cg:(g + 1) * cg],
                    params["w1"][g], precision=hi) for g in range(r)], axis=-1)
    y1 = _mish_ref(gn(y1, params["gn1_gamma"][0], params["gn1_beta"][0], r))
    # conv3
    y1p = jnp.pad(y1, ((0, 0), (1, 1), (1, 1), (0, 0)))
    gouts = []
    for g in range(r):
        acc = jnp.zeros((N, H, W, C), jnp.float32)
        for kh in range(3):
            for kw in range(3):
                acc = acc + jnp.einsum(
                    "nhwi,io->nhwo",
                    y1p[:, kh:kh + H, kw:kw + W, g * cg:(g + 1) * cg],
                    params["w3"][g, kh, kw], precision=hi)
        gouts.append(acc)
    y3 = jnp.concatenate(gouts, axis=-1)
    y3 = _mish_ref(gn(y3, params["gn3_gamma"][0], params["gn3_beta"][0], r))
    # split attention
    splits = [y3[..., i * C:(i + 1) * C] for i in range(r)]
    added = sum(splits)
    pooled = jnp.mean(added, axis=(1, 2))                           # [N, C]
    d1 = jnp.dot(pooled, params["wd1"], precision=hi) + params["bd1"]
    d1 = (d1 - params["bn_mean"]) * jax.lax.rsqrt(params["bn_var"] + EPS_BN)
    d1 = _mish_ref(d1 * params["bn_gamma"] + params["bn_beta"])     # [N, inner]
    inner = d1.shape[1]
    ig = inner // r
    out = jnp.zeros((N, H, W, C), jnp.float32)
    for i in range(r):
        d2i = jnp.dot(d1[:, i * ig:(i + 1) * ig], params["wd2"][i],
                      precision=hi) + params["bd2"][i]
        attn = jax.nn.softmax(d2i, axis=-1)
        out = out + attn[:, None, None, :] * splits[i]
    return jnp.transpose(out, (0, 3, 1, 2))


# -------------------- deterministic synthetic parameters -----------------------
def init_params(key, C, r):
    cg = C // r
    Cr = C * r
    inner = 2 * C
    ks = jax.random.split(key, 12)
    return dict(
        # conv1: grouped 1x1, stored as (group, in/g, out/g)
        w1=0.3 * jax.random.normal(ks[0], (r, cg, cg), jnp.float32),
        gn1_gamma=1.0 + 0.1 * jax.random.normal(ks[1], (1, C), jnp.float32),
        gn1_beta=0.1 * jax.random.normal(ks[2], (1, C), jnp.float32),
        # conv3: grouped 3x3, stored as (group, kh, kw, in/g, out/g)
        w3=0.2 * jax.random.normal(ks[3], (r, 3, 3, cg, C), jnp.float32),
        gn3_gamma=1.0 + 0.1 * jax.random.normal(ks[4], (1, Cr), jnp.float32),
        gn3_beta=0.1 * jax.random.normal(ks[5], (1, Cr), jnp.float32),
        # split-attention dense1 (1x1 conv, C -> 2C) + BatchNorm (inference)
        wd1=0.3 * jax.random.normal(ks[6], (C, inner), jnp.float32),
        bd1=0.1 * jax.random.normal(ks[7], (1, inner), jnp.float32),
        bn_gamma=1.0 + 0.1 * jax.random.normal(ks[8], (1, inner), jnp.float32),
        bn_beta=0.1 * jax.random.normal(ks[9], (1, inner), jnp.float32),
        bn_mean=jnp.zeros((1, inner), jnp.float32),
        bn_var=jnp.ones((1, inner), jnp.float32),
        # split-attention dense2 (grouped 1x1, 2C -> C*r, groups=r)
        wd2=0.3 * jax.random.normal(ks[10], (r, inner // r, C), jnp.float32),
        bd2=0.1 * jax.random.normal(ks[11], (r, C), jnp.float32),
    )


if __name__ == "__main__":
    r = 2
    N, C, H, W = 2, 8, 16, 16
    key = jax.random.PRNGKey(0)
    kx, kp = jax.random.split(key)
    x = jax.random.normal(kx, (N, C, H, W), jnp.float32)
    params = init_params(kp, C, r)

    out = cardinal_block_forward(x, params, r)
    out = jax.block_until_ready(out)

    assert out.shape == (N, C, H, W)
    ref = reference_forward(x, params, r)
    err = float(jnp.max(jnp.abs(out - ref)))
    if not bool(jnp.all(jnp.isfinite(out))) or err > 2e-2:
        raise AssertionError(f"kernel/reference mismatch, max abs err = {err}")
    print("KERNEL_OK")
</pallas_src>

<mosaic_0001>
module attributes {stable_mosaic.version = 11 : i64} {
  func.func @kernel(%arg0: i32, %arg1: memref<1x8x256xf32, #tpu.memory_space<vmem>>, %arg2: memref<8x8xf32, #tpu.memory_space<vmem>>, %arg3: memref<8x8xf32, #tpu.memory_space<vmem>>, %arg4: memref<8x1xf32, #tpu.memory_space<vmem>>, %arg5: memref<8x1xf32, #tpu.memory_space<vmem>>, %arg6: memref<16x72xf32, #tpu.memory_space<vmem>>, %arg7: memref<16x16xf32, #tpu.memory_space<vmem>>, %arg8: memref<16x1xf32, #tpu.memory_space<vmem>>, %arg9: memref<16x1xf32, #tpu.memory_space<vmem>>, %arg10: memref<3x256xf32, #tpu.memory_space<vmem>>, %arg11: memref<16x8xf32, #tpu.memory_space<vmem>>, %arg12: memref<16x1xf32, #tpu.memory_space<vmem>>, %arg13: memref<16x1xf32, #tpu.memory_space<vmem>>, %arg14: memref<16x1xf32, #tpu.memory_space<vmem>>, %arg15: memref<16x1xf32, #tpu.memory_space<vmem>>, %arg16: memref<16x1xf32, #tpu.memory_space<vmem>>, %arg17: memref<16x16xf32, #tpu.memory_space<vmem>>, %arg18: memref<16x1xf32, #tpu.memory_space<vmem>>, %arg19: memref<1x8x256xf32, #tpu.memory_space<vmem>>) attributes {dimension_semantics = [#tpu.dimension_semantics<parallel>], iteration_bounds = array<i64: 2>, scalar_prefetch = 0 : i64, scratch_operands = 0 : i64, tpu.core_type = #tpu.core_type<tc>, window_params = [{transform_indices = @transform_0, window_bounds = array<i64: 1, 8, 256>}, {pipeline_mode = #tpu.pipeline_mode<synchronous>, transform_indices = @transform_1, window_bounds = array<i64: 8, 8>}, {pipeline_mode = #tpu.pipeline_mode<synchronous>, transform_indices = @transform_2, window_bounds = array<i64: 8, 8>}, {pipeline_mode = #tpu.pipeline_mode<synchronous>, transform_indices = @transform_3, window_bounds = array<i64: 8, 1>}, {pipeline_mode = #tpu.pipeline_mode<synchronous>, transform_indices = @transform_4, window_bounds = array<i64: 8, 1>}, {pipeline_mode = #tpu.pipeline_mode<synchronous>, transform_indices = @transform_5, window_bounds = array<i64: 16, 72>}, {pipeline_mode = #tpu.pipeline_mode<synchronous>, transform_indices = @transform_6, window_bounds = array<i64: 16, 16>}, {pipeline_mode = #tpu.pipeline_mode<synchronous>, transform_indices = @transform_7, window_bounds = array<i64: 16, 1>}, {pipeline_mode = #tpu.pipeline_mode<synchronous>, transform_indices = @transform_8, window_bounds = array<i64: 16, 1>}, {pipeline_mode = #tpu.pipeline_mode<synchronous>, transform_indices = @transform_9, window_bounds = array<i64: 3, 256>}, {pipeline_mode = #tpu.pipeline_mode<synchronous>, transform_indices = @transform_10, window_bounds = array<i64: 16, 8>}, {pipeline_mode = #tpu.pipeline_mode<synchronous>, transform_indices = @transform_11, window_bounds = array<i64: 16, 1>}, {pipeline_mode = #tpu.pipeline_mode<synchronous>, transform_indices = @transform_12, window_bounds = array<i64: 16, 1>}, {pipeline_mode = #tpu.pipeline_mode<synchronous>, transform_indices = @transform_13, window_bounds = array<i64: 16, 1>}, {pipeline_mode = #tpu.pipeline_mode<synchronous>, transform_indices = @transform_14, window_bounds = array<i64: 16, 1>}, {pipeline_mode = #tpu.pipeline_mode<synchronous>, transform_indices = @transform_15, window_bounds = array<i64: 16, 1>}, {pipeline_mode = #tpu.pipeline_mode<synchronous>, transform_indices = @transform_16, window_bounds = array<i64: 16, 16>}, {pipeline_mode = #tpu.pipeline_mode<synchronous>, transform_indices = @transform_17, window_bounds = array<i64: 16, 1>}, {transform_indices = @transform_18, window_bounds = array<i64: 1, 8, 256>}]} {
    %c0 = arith.constant 0 : index
    %c0_0 = arith.constant 0 : index
    %c0_1 = arith.constant 0 : index
    %0 = vector.load %arg1[%c0, %c0_0, %c0_1] : memref<1x8x256xf32, #tpu.memory_space<vmem>>, vector<1x8x256xf32>
    %1 = vector.shape_cast %0 : vector<1x8x256xf32> to vector<8x256xf32>
    %c0_2 = arith.constant 0 : index
    %c0_3 = arith.constant 0 : index
    %2 = vector.load %arg2[%c0_2, %c0_3] : memref<8x8xf32, #tpu.memory_space<vmem>>, vector<8x8xf32>
    %cst = arith.constant dense<0.000000e+00> : vector<8x256xf32>
    %3 = tpu.matmul %2, %1, %cst {dimension_numbers = #tpu.dot_dimension_numbers<[1], [0], [0], [1], [0, 0, 1, 1], [], []>} : vector<8x8xf32>, vector<8x256xf32>, vector<8x256xf32> -> vector<8x256xf32>
    %c0_4 = arith.constant 0 : index
    %c0_5 = arith.constant 0 : index
    %4 = vector.load %arg3[%c0_4, %c0_5] : memref<8x8xf32, #tpu.memory_space<vmem>>, vector<8x8xf32>
    %c0_6 = arith.constant 0 : index
    %c0_7 = arith.constant 0 : index
    %5 = vector.load %arg4[%c0_6, %c0_7] : memref<8x1xf32, #tpu.memory_space<vmem>>, vector<8x1xf32>
    %c0_8 = arith.constant 0 : index
    %c0_9 = arith.constant 0 : index
    %6 = vector.load %arg5[%c0_8, %c0_9] : memref<8x1xf32, #tpu.memory_space<vmem>>, vector<8x1xf32>
    %cst_10 = arith.constant dense<0.000000e+00> : vector<8xf32>
    %7 = vector.multi_reduction <add>, %3, %cst_10 [1] : vector<8x256xf32> to vector<8xf32>
    %8 = vector.shape_cast %7 : vector<8xf32> to vector<8x1xf32>
    %9 = arith.mulf %3, %3 : vector<8x256xf32>
    %cst_11 = arith.constant dense<0.000000e+00> : vector<8xf32>
    %10 = vector.multi_reduction <add>, %9, %cst_11 [1] : vector<8x256xf32> to vector<8xf32>
    %11 = vector.shape_cast %10 : vector<8xf32> to vector<8x1xf32>
    %cst_12 = arith.constant dense<0.000000e+00> : vector<8x1xf32>
    %12 = tpu.matmul %4, %8, %cst_12 {dimension_numbers = #tpu.dot_dimension_numbers<[1], [0], [0], [1], [0, 0, 1, 1], [], []>} : vector<8x8xf32>, vector<8x1xf32>, vector<8x1xf32> -> vector<8x1xf32>
    %cst_13 = arith.constant dense<0.000000e+00> : vector<8x1xf32>
    %13 = tpu.matmul %4, %11, %cst_13 {dimension_numbers = #tpu.dot_dimension_numbers<[1], [0], [0], [1], [0, 0, 1, 1], [], []>} : vector<8x8xf32>, vector<8x1xf32>, vector<8x1xf32> -> vector<8x1xf32>
    %14 = arith.mulf %12, %12 : vector<8x1xf32>
    %15 = arith.subf %13, %14 : vector<8x1xf32>
    %cst_14 = arith.constant 0.000000e+00 : f32
    %16 = vector.broadcast %cst_14 : f32 to vector<8x1xf32>
    %17 = arith.maximumf %15, %16 : vector<8x1xf32>
    %cst_15 = arith.constant 1.000000e-03 : f32
    %18 = vector.broadcast %cst_15 : f32 to vector<8x1xf32>
    %19 = arith.addf %17, %18 : vector<8x1xf32>
    %20 = math.rsqrt %19 : vector<8x1xf32>
    %21 = arith.mulf %5, %20 : vector<8x1xf32>
    %22 = arith.mulf %12, %21 : vector<8x1xf32>
    %23 = arith.subf %6, %22 : vector<8x1xf32>
    %24 = vector.broadcast %21 : vector<8x1xf32> to vector<8x256xf32>
    %25 = arith.mulf %3, %24 : vector<8x256xf32>
    %26 = vector.broadcast %23 : vector<8x1xf32> to vector<8x256xf32>
    %27 = arith.addf %25, %26 : vector<8x256xf32>
    %cst_16 = arith.constant 2.000000e+01 : f32
    %28 = vector.broadcast %cst_16 : f32 to vector<8x256xf32>
    %29 = arith.minimumf %27, %28 : vector<8x256xf32>
    %30 = math.exp %29 : vector<8x256xf32>
    %cst_17 = arith.constant 1.000000e+00 : f32
    %31 = vector.broadcast %cst_17 : f32 to vector<8x256xf32>
    %32 = arith.addf %31, %30 : vector<8x256xf32>
    %33 = arith.mulf %32, %32 : vector<8x256xf32>
    %cst_18 = arith.constant 1.000000e+00 : f32
    %34 = vector.broadcast %cst_18 : f32 to vector<8x256xf32>
    %35 = arith.subf %33, %34 : vector<8x256xf32>
    %36 = arith.mulf %27, %35 : vector<8x256xf32>
    %cst_19 = arith.constant 1.000000e+00 : f32
    %37 = vector.broadcast %cst_19 : f32 to vector<8x256xf32>
    %38 = arith.addf %33, %37 : vector<8x256xf32>
    %39 = arith.divf %36, %38 : vector<8x256xf32>
    %cst_20 = arith.constant 0.000000e+00 : f32
    %40 = vector.broadcast %cst_20 : f32 to vector<8x17xf32>
    %41 = tpu.concatenate %40, %39, %40 in 1 : vector<8x17xf32>, vector<8x256xf32>, vector<8x17xf32> -> vector<8x290xf32>
    %42 = vector.extract_strided_slice %41 {offsets = [0, 0], sizes = [8, 256], strides = [1, 1]} : vector<8x290xf32> to vector<8x256xf32>
    %c0_21 = arith.constant 0 : index
    %c0_22 = arith.constant 0 : index
    %43 = vector.load %arg10[%c0_21, %c0_22] : memref<3x256xf32, #tpu.memory_space<vmem>>, vector<1x256xf32>
    %44 = vector.broadcast %43 : vector<1x256xf32> to vector<8x256xf32>
    %45 = arith.mulf %42, %44 : vector<8x256xf32>
    %46 = vector.extract_strided_slice %41 {offsets = [0, 1], sizes = [8, 256], strides = [1, 1]} : vector<8x290xf32> to vector<8x256xf32>
    %47 = vector.extract_strided_slice %41 {offsets = [0, 2], sizes = [8, 256], strides = [1, 1]} : vector<8x290xf32> to vector<8x256xf32>
    %c2 = arith.constant 2 : index
    %c0_23 = arith.constant 0 : index
    %48 = vector.load %arg10[%c2, %c0_23] : memref<3x256xf32, #tpu.memory_space<vmem>>, vector<1x256xf32>
    %49 = vector.broadcast %48 : vector<1x256xf32> to vector<8x256xf32>
    %50 = arith.mulf %47, %49 : vector<8x256xf32>
    %51 = vector.extract_strided_slice %41 {offsets = [0, 16], sizes = [8, 256], strides = [1, 1]} : vector<8x290xf32> to vector<8x256xf32>
    %c0_24 = arith.constant 0 : index
    %c0_25 = arith.constant 0 : index
    %52 = vector.load %arg10[%c0_24, %c0_25] : memref<3x256xf32, #tpu.memory_space<vmem>>, vector<1x256xf32>
    %53 = vector.broadcast %52 : vector<1x256xf32> to vector<8x256xf32>
    %54 = arith.mulf %51, %53 : vector<8x256xf32>
    %55 = vector.extract_strided_slice %41 {offsets = [0, 17], sizes = [8, 256], strides = [1, 1]} : vector<8x290xf32> to vector<8x256xf32>
    %56 = vector.extract_strided_slice %41 {offsets = [0, 18], sizes = [8, 256], strides = [1, 1]} : vector<8x290xf32> to vector<8x256xf32>
    %c2_26 = arith.constant 2 : index
    %c0_27 = arith.constant 0 : index
    %57 = vector.load %arg10[%c2_26, %c0_27] : memref<3x256xf32, #tpu.memory_space<vmem>>, vector<1x256xf32>
    %58 = vector.broadcast %57 : vector<1x256xf32> to vector<8x256xf32>
    %59 = arith.mulf %56, %58 : vector<8x256xf32>
    %60 = vector.extract_strided_slice %41 {offsets = [0, 32], sizes = [8, 256], strides = [1, 1]} : vector<8x290xf32> to vector<8x256xf32>
    %c0_28 = arith.constant 0 : index
    %c0_29 = arith.constant 0 : index
    %61 = vector.load %arg10[%c0_28, %c0_29] : memref<3x256xf32, #tpu.memory_space<vmem>>, vector<1x256xf32>
    %62 = vector.broadcast %61 : vector<1x256xf32> to vector<8x256xf32>
    %63 = arith.mulf %60, %62 : vector<8x256xf32>
    %64 = vector.extract_strided_slice %41 {offsets = [0, 33], sizes = [8, 256], strides = [1, 1]} : vector<8x290xf32> to vector<8x256xf32>
    %65 = vector.extract_strided_slice %41 {offsets = [0, 34], sizes = [8, 256], strides = [1, 1]} : vector<8x290xf32> to vector<8x256xf32>
    %c2_30 = arith.constant 2 : index
    %c0_31 = arith.constant 0 : index
    %66 = vector.load %arg10[%c2_30, %c0_31] : memref<3x256xf32, #tpu.memory_space<vmem>>, vector<1x256xf32>
    %67 = vector.broadcast %66 : vector<1x256xf32> to vector<8x256xf32>
    %68 = arith.mulf %65, %67 : vector<8x256xf32>
    %69 = tpu.concatenate %45, %46, %50, %54, %55, %59, %63, %64, %68 in 0 : vector<8x256xf32>, vector<8x256xf32>, vector<8x256xf32>, vector<8x256xf32>, vector<8x256xf32>, vector<8x256xf32>, vector<8x256xf32>, vector<8x256xf32>, vector<8x256xf32> -> vector<72x256xf32>
    %c0_32 = arith.constant 0 : index
    %c0_33 = arith.constant 0 : index
    %70 = vector.load %arg6[%c0_32, %c0_33] : memref<16x72xf32, #tpu.memory_space<vmem>>, vector<16x72xf32>
    %cst_34 = arith.constant dense<0.000000e+00> : vector<16x256xf32>
    %71 = tpu.matmul %70, %69, %cst_34 {dimension_numbers = #tpu.dot_dimension_numbers<[1], [0], [0], [1], [0, 0, 1, 1], [], []>} : vector<16x72xf32>, vector<72x256xf32>, vector<16x256xf32> -> vector<16x256xf32>
    %c0_35 = arith.constant 0 : index
    %c0_36 = arith.constant 0 : index
    %72 = vector.load %arg7[%c0_35, %c0_36] : memref<16x16xf32, #tpu.memory_space<vmem>>, vector<16x16xf32>
    %c0_37 = arith.constant 0 : index
    %c0_38 = arith.constant 0 : index
    %73 = vector.load %arg8[%c0_37, %c0_38] : memref<16x1xf32, #tpu.memory_space<vmem>>, vector<16x1xf32>
    %c0_39 = arith.constant 0 : index
    %c0_40 = arith.constant 0 : index
    %74 = vector.load %arg9[%c0_39, %c0_40] : memref<16x1xf32, #tpu.memory_space<vmem>>, vector<16x1xf32>
    %cst_41 = arith.constant dense<0.000000e+00> : vector<16xf32>
    %75 = vector.multi_reduction <add>, %71, %cst_41 [1] : vector<16x256xf32> to vector<16xf32>
    %76 = vector.shape_cast %75 : vector<16xf32> to vector<16x1xf32>
    %77 = arith.mulf %71, %71 : vector<16x256xf32>
    %cst_42 = arith.constant dense<0.000000e+00> : vector<16xf32>
    %78 = vector.multi_reduction <add>, %77, %cst_42 [1] : vector<16x256xf32> to vector<16xf32>
    %79 = vector.shape_cast %78 : vector<16xf32> to vector<16x1xf32>
    %cst_43 = arith.constant dense<0.000000e+00> : vector<16x1xf32>
    %80 = tpu.matmul %72, %76, %cst_43 {dimension_numbers = #tpu.dot_dimension_numbers<[1], [0], [0], [1], [0, 0, 1, 1], [], []>} : vector<16x16xf32>, vector<16x1xf32>, vector<16x1xf32> -> vector<16x1xf32>
    %cst_44 = arith.constant dense<0.000000e+00> : vector<16x1xf32>
    %81 = tpu.matmul %72, %79, %cst_44 {dimension_numbers = #tpu.dot_dimension_numbers<[1], [0], [0], [1], [0, 0, 1, 1], [], []>} : vector<16x16xf32>, vector<16x1xf32>, vector<16x1xf32> -> vector<16x1xf32>
    %82 = arith.mulf %80, %80 : vector<16x1xf32>
    %83 = arith.subf %81, %82 : vector<16x1xf32>
    %cst_45 = arith.constant 0.000000e+00 : f32
    %84 = vector.broadcast %cst_45 : f32 to vector<16x1xf32>
    %85 = arith.maximumf %83, %84 : vector<16x1xf32>
    %cst_46 = arith.constant 1.000000e-03 : f32
    %86 = vector.broadcast %cst_46 : f32 to vector<16x1xf32>
    %87 = arith.addf %85, %86 : vector<16x1xf32>
    %88 = math.rsqrt %87 : vector<16x1xf32>
    %89 = arith.mulf %73, %88 : vector<16x1xf32>
    %90 = arith.mulf %80, %89 : vector<16x1xf32>
    %91 = arith.subf %74, %90 : vector<16x1xf32>
    %92 = vector.broadcast %89 : vector<16x1xf32> to vector<16x256xf32>
    %93 = arith.mulf %71, %92 : vector<16x256xf32>
    %94 = vector.broadcast %91 : vector<16x1xf32> to vector<16x256xf32>
    %95 = arith.addf %93, %94 : vector<16x256xf32>
    %cst_47 = arith.constant 2.000000e+01 : f32
    %96 = vector.broadcast %cst_47 : f32 to vector<16x256xf32>
    %97 = arith.minimumf %95, %96 : vector<16x256xf32>
    %98 = math.exp %97 : vector<16x256xf32>
    %cst_48 = arith.constant 1.000000e+00 : f32
    %99 = vector.broadcast %cst_48 : f32 to vector<16x256xf32>
    %100 = arith.addf %99, %98 : vector<16x256xf32>
    %101 = arith.mulf %100, %100 : vector<16x256xf32>
    %cst_49 = arith.constant 1.000000e+00 : f32
    %102 = vector.broadcast %cst_49 : f32 to vector<16x256xf32>
    %103 = arith.subf %101, %102 : vector<16x256xf32>
    %104 = arith.mulf %95, %103 : vector<16x256xf32>
    %cst_50 = arith.constant 1.000000e+00 : f32
    %105 = vector.broadcast %cst_50 : f32 to vector<16x256xf32>
    %106 = arith.addf %101, %105 : vector<16x256xf32>
    %107 = arith.divf %104, %106 : vector<16x256xf32>
    %108 = vector.extract_strided_slice %107 {offsets = [0, 0], sizes = [8, 256], strides = [1, 1]} : vector<16x256xf32> to vector<8x256xf32>
    %109 = vector.extract_strided_slice %107 {offsets = [8, 0], sizes = [8, 256], strides = [1, 1]} : vector<16x256xf32> to vector<8x256xf32>
    %110 = arith.addf %108, %109 : vector<8x256xf32>
    %cst_51 = arith.constant dense<0.000000e+00> : vector<8xf32>
    %111 = vector.multi_reduction <add>, %110, %cst_51 [1] : vector<8x256xf32> to vector<8xf32>
    %112 = vector.shape_cast %111 : vector<8xf32> to vector<8x1xf32>
    %cst_52 = arith.constant 3.906250e-03 : f32
    %113 = vector.broadcast %cst_52 : f32 to vector<8x1xf32>
    %114 = arith.mulf %112, %113 : vector<8x1xf32>
    %c0_53 = arith.constant 0 : index
    %c0_54 = arith.constant 0 : index
    %115 = vector.load %arg11[%c0_53, %c0_54] : memref<16x8xf32, #tpu.memory_space<vmem>>, vector<16x8xf32>
    %cst_55 = arith.constant dense<0.000000e+00> : vector<16x1xf32>
    %116 = tpu.matmul %115, %114, %cst_55 {dimension_numbers = #tpu.dot_dimension_numbers<[1], [0], [0], [1], [0, 0, 1, 1], [], []>} : vector<16x8xf32>, vector<8x1xf32>, vector<16x1xf32> -> vector<16x1xf32>
    %c0_56 = arith.constant 0 : index
    %c0_57 = arith.constant 0 : index
    %117 = vector.load %arg12[%c0_56, %c0_57] : memref<16x1xf32, #tpu.memory_space<vmem>>, vector<16x1xf32>
    %118 = arith.addf %116, %117 : vector<16x1xf32>
    %c0_58 = arith.constant 0 : index
    %c0_59 = arith.constant 0 : index
    %119 = vector.load %arg15[%c0_58, %c0_59] : memref<16x1xf32, #tpu.memory_space<vmem>>, vector<16x1xf32>
    %120 = arith.subf %118, %119 : vector<16x1xf32>
    %c0_60 = arith.constant 0 : index
    %c0_61 = arith.constant 0 : index
    %121 = vector.load %arg16[%c0_60, %c0_61] : memref<16x1xf32, #tpu.memory_space<vmem>>, vector<16x1xf32>
    %cst_62 = arith.constant 1.000000e-03 : f32
    %122 = vector.broadcast %cst_62 : f32 to vector<16x1xf32>
    %123 = arith.addf %121, %122 : vector<16x1xf32>
    %124 = math.rsqrt %123 : vector<16x1xf32>
    %125 = arith.mulf %120, %124 : vector<16x1xf32>
    %c0_63 = arith.constant 0 : index
    %c0_64 = arith.constant 0 : index
    %126 = vector.load %arg13[%c0_63, %c0_64] : memref<16x1xf32, #tpu.memory_space<vmem>>, vector<16x1xf32>
    %127 = arith.mulf %125, %126 : vector<16x1xf32>
    %c0_65 = arith.constant 0 : index
    %c0_66 = arith.constant 0 : index
    %128 = vector.load %arg14[%c0_65, %c0_66] : memref<16x1xf32, #tpu.memory_space<vmem>>, vector<16x1xf32>
    %129 = arith.addf %127, %128 : vector<16x1xf32>
    %cst_67 = arith.constant 2.000000e+01 : f32
    %130 = vector.broadcast %cst_67 : f32 to vector<16x1xf32>
    %131 = arith.minimumf %129, %130 : vector<16x1xf32>
    %132 = math.exp %131 : vector<16x1xf32>
    %cst_68 = arith.constant 1.000000e+00 : f32
    %133 = vector.broadcast %cst_68 : f32 to vector<16x1xf32>
    %134 = arith.addf %133, %132 : vector<16x1xf32>
    %135 = arith.mulf %134, %134 : vector<16x1xf32>
    %cst_69 = arith.constant 1.000000e+00 : f32
    %136 = vector.broadcast %cst_69 : f32 to vector<16x1xf32>
    %137 = arith.subf %135, %136 : vector<16x1xf32>
    %138 = arith.mulf %129, %137 : vector<16x1xf32>
    %cst_70 = arith.constant 1.000000e+00 : f32
    %139 = vector.broadcast %cst_70 : f32 to vector<16x1xf32>
    %140 = arith.addf %135, %139 : vector<16x1xf32>
    %141 = arith.divf %138, %140 : vector<16x1xf32>
    %c0_71 = arith.constant 0 : index
    %c0_72 = arith.constant 0 : index
    %142 = vector.load %arg17[%c0_71, %c0_72] : memref<16x16xf32, #tpu.memory_space<vmem>>, vector<16x16xf32>
    %cst_73 = arith.constant dense<0.000000e+00> : vector<16x1xf32>
    %143 = tpu.matmul %142, %141, %cst_73 {dimension_numbers = #tpu.dot_dimension_numbers<[1], [0], [0], [1], [0, 0, 1, 1], [], []>} : vector<16x16xf32>, vector<16x1xf32>, vector<16x1xf32> -> vector<16x1xf32>
    %c0_74 = arith.constant 0 : index
    %c0_75 = arith.constant 0 : index
    %144 = vector.load %arg18[%c0_74, %c0_75] : memref<16x1xf32, #tpu.memory_space<vmem>>, vector<16x1xf32>
    %145 = arith.addf %143, %144 : vector<16x1xf32>
    %cst_76 = arith.constant 0.000000e+00 : f32
    %146 = vector.broadcast %cst_76 : f32 to vector<8x256xf32>
    %147 = vector.extract_strided_slice %145 {offsets = [0, 0], sizes = [8, 1], strides = [1, 1]} : vector<16x1xf32> to vector<8x1xf32>
    %148 = vector.shape_cast %147 : vector<8x1xf32> to vector<1x8x1xf32>
    %cst_77 = arith.constant dense<0xFF800000> : vector<1xf32>
    %149 = vector.multi_reduction <maximumf>, %148, %cst_77 [1, 2] : vector<1x8x1xf32> to vector<1xf32>
    %150 = vector.shape_cast %149 : vector<1xf32> to vector<1x1x1xf32>
    %151 = vector.extract %150[0, 0, 0] : f32 from vector<1x1x1xf32>
    %152 = vector.broadcast %151 : f32 to vector<8x1xf32>
    %153 = arith.subf %147, %152 : vector<8x1xf32>
    %154 = math.exp %153 : vector<8x1xf32>
    %155 = vector.shape_cast %154 : vector<8x1xf32> to vector<1x8x1xf32>
    %cst_78 = arith.constant dense<0.000000e+00> : vector<1xf32>
    %156 = vector.multi_reduction <add>, %155, %cst_78 [1, 2] : vector<1x8x1xf32> to vector<1xf32>
    %157 = vector.shape_cast %156 : vector<1xf32> to vector<1x1x1xf32>
    %158 = vector.extract %157[0, 0, 0] : f32 from vector<1x1x1xf32>
    %159 = vector.broadcast %158 : f32 to vector<8x1xf32>
    %160 = arith.divf %154, %159 : vector<8x1xf32>
    %161 = vector.extract_strided_slice %107 {offsets = [0, 0], sizes = [8, 256], strides = [1, 1]} : vector<16x256xf32> to vector<8x256xf32>
    %162 = vector.broadcast %160 : vector<8x1xf32> to vector<8x256xf32>
    %163 = arith.mulf %162, %161 : vector<8x256xf32>
    %164 = arith.addf %146, %163 : vector<8x256xf32>
    %165 = vector.extract_strided_slice %145 {offsets = [8, 0], sizes = [8, 1], strides = [1, 1]} : vector<16x1xf32> to vector<8x1xf32>
    %166 = vector.shape_cast %165 : vector<8x1xf32> to vector<1x8x1xf32>
    %cst_79 = arith.constant dense<0xFF800000> : vector<1xf32>
    %167 = vector.multi_reduction <maximumf>, %166, %cst_79 [1, 2] : vector<1x8x1xf32> to vector<1xf32>
    %168 = vector.shape_cast %167 : vector<1xf32> to vector<1x1x1xf32>
    %169 = vector.extract %168[0, 0, 0] : f32 from vector<1x1x1xf32>
    %170 = vector.broadcast %169 : f32 to vector<8x1xf32>
    %171 = arith.subf %165, %170 : vector<8x1xf32>
    %172 = math.exp %171 : vector<8x1xf32>
    %173 = vector.shape_cast %172 : vector<8x1xf32> to vector<1x8x1xf32>
    %cst_80 = arith.constant dense<0.000000e+00> : vector<1xf32>
    %174 = vector.multi_reduction <add>, %173, %cst_80 [1, 2] : vector<1x8x1xf32> to vector<1xf32>
    %175 = vector.shape_cast %174 : vector<1xf32> to vector<1x1x1xf32>
    %176 = vector.extract %175[0, 0, 0] : f32 from vector<1x1x1xf32>
    %177 = vector.broadcast %176 : f32 to vector<8x1xf32>
    %178 = arith.divf %172, %177 : vector<8x1xf32>
    %179 = vector.extract_strided_slice %107 {offsets = [8, 0], sizes = [8, 256], strides = [1, 1]} : vector<16x256xf32> to vector<8x256xf32>
    %180 = vector.broadcast %178 : vector<8x1xf32> to vector<8x256xf32>
    %181 = arith.mulf %180, %179 : vector<8x256xf32>
    %182 = arith.addf %164, %181 : vector<8x256xf32>
    %c0_81 = arith.constant 0 : index
    %c0_82 = arith.constant 0 : index
    %c0_83 = arith.constant 0 : index
    %183 = vector.load %arg19[%c0_81, %c0_82, %c0_83] : memref<1x8x256xf32, #tpu.memory_space<vmem>>, vector<1x8x256xf32>
    %184 = vector.shape_cast %183 : vector<1x8x256xf32> to vector<8x256xf32>
    %185 = vector.shape_cast %182 : vector<8x256xf32> to vector<1x8x256xf32>
    tpu.vector_store %arg19[%c0_81, %c0_82, %c0_83], %185 {strides = array<i32>} : memref<1x8x256xf32, #tpu.memory_space<vmem>>, vector<1x8x256xf32>,
    return
  }
  func.func @transform_0(%arg0: i32) -> (i32, i32, i32) {
    %c0_i32 = arith.constant 0 : i32
    %c0_i32_0 = arith.constant 0 : i32
    %c0_i32_1 = arith.constant 0 : i32
    return %arg0, %c0_i32, %c0_i32_0 : i32, i32, i32
  }
  func.func @transform_1(%arg0: i32) -> (i32, i32) {
    %c0_i32 = arith.constant 0 : i32
    %c0_i32_0 = arith.constant 0 : i32
    %c0_i32_1 = arith.constant 0 : i32
    return %c0_i32, %c0_i32_0 : i32, i32
  }
  func.func @transform_2(%arg0: i32) -> (i32, i32) {
    %c0_i32 = arith.constant 0 : i32
    %c0_i32_0 = arith.constant 0 : i32
    %c0_i32_1 = arith.constant 0 : i32
    return %c0_i32, %c0_i32_0 : i32, i32
  }
  func.func @transform_3(%arg0: i32) -> (i32, i32) {
    %c0_i32 = arith.constant 0 : i32
    %c0_i32_0 = arith.constant 0 : i32
    %c0_i32_1 = arith.constant 0 : i32
    return %c0_i32, %c0_i32_0 : i32, i32
  }
  func.func @transform_4(%arg0: i32) -> (i32, i32) {
    %c0_i32 = arith.constant 0 : i32
    %c0_i32_0 = arith.constant 0 : i32
    %c0_i32_1 = arith.constant 0 : i32
    return %c0_i32, %c0_i32_0 : i32, i32
  }
  func.func @transform_5(%arg0: i32) -> (i32, i32) {
    %c0_i32 = arith.constant 0 : i32
    %c0_i32_0 = arith.constant 0 : i32
    %c0_i32_1 = arith.constant 0 : i32
    return %c0_i32, %c0_i32_0 : i32, i32
  }
  func.func @transform_6(%arg0: i32) -> (i32, i32) {
    %c0_i32 = arith.constant 0 : i32
    %c0_i32_0 = arith.constant 0 : i32
    %c0_i32_1 = arith.constant 0 : i32
    return %c0_i32, %c0_i32_0 : i32, i32
  }
  func.func @transform_7(%arg0: i32) -> (i32, i32) {
    %c0_i32 = arith.constant 0 : i32
    %c0_i32_0 = arith.constant 0 : i32
    %c0_i32_1 = arith.constant 0 : i32
    return %c0_i32, %c0_i32_0 : i32, i32
  }
  func.func @transform_8(%arg0: i32) -> (i32, i32) {
    %c0_i32 = arith.constant 0 : i32
    %c0_i32_0 = arith.constant 0 : i32
    %c0_i32_1 = arith.constant 0 : i32
    return %c0_i32, %c0_i32_0 : i32, i32
  }
  func.func @transform_9(%arg0: i32) -> (i32, i32) {
    %c0_i32 = arith.constant 0 : i32
    %c0_i32_0 = arith.constant 0 : i32
    %c0_i32_1 = arith.constant 0 : i32
    return %c0_i32, %c0_i32_0 : i32, i32
  }
  func.func @transform_10(%arg0: i32) -> (i32, i32) {
    %c0_i32 = arith.constant 0 : i32
    %c0_i32_0 = arith.constant 0 : i32
    %c0_i32_1 = arith.constant 0 : i32
    return %c0_i32, %c0_i32_0 : i32, i32
  }
  func.func @transform_11(%arg0: i32) -> (i32, i32) {
    %c0_i32 = arith.constant 0 : i32
    %c0_i32_0 = arith.constant 0 : i32
    %c0_i32_1 = arith.constant 0 : i32
    return %c0_i32, %c0_i32_0 : i32, i32
  }
  func.func @transform_12(%arg0: i32) -> (i32, i32) {
    %c0_i32 = arith.constant 0 : i32
    %c0_i32_0 = arith.constant 0 : i32
    %c0_i32_1 = arith.constant 0 : i32
    return %c0_i32, %c0_i32_0 : i32, i32
  }
  func.func @transform_13(%arg0: i32) -> (i32, i32) {
    %c0_i32 = arith.constant 0 : i32
    %c0_i32_0 = arith.constant 0 : i32
    %c0_i32_1 = arith.constant 0 : i32
    return %c0_i32, %c0_i32_0 : i32, i32
  }
  func.func @transform_14(%arg0: i32) -> (i32, i32) {
    %c0_i32 = arith.constant 0 : i32
    %c0_i32_0 = arith.constant 0 : i32
    %c0_i32_1 = arith.constant 0 : i32
    return %c0_i32, %c0_i32_0 : i32, i32
  }
  func.func @transform_15(%arg0: i32) -> (i32, i32) {
    %c0_i32 = arith.constant 0 : i32
    %c0_i32_0 = arith.constant 0 : i32
    %c0_i32_1 = arith.constant 0 : i32
    return %c0_i32, %c0_i32_0 : i32, i32
  }
  func.func @transform_16(%arg0: i32) -> (i32, i32) {
    %c0_i32 = arith.constant 0 : i32
    %c0_i32_0 = arith.constant 0 : i32
    %c0_i32_1 = arith.constant 0 : i32
    return %c0_i32, %c0_i32_0 : i32, i32
  }
  func.func @transform_17(%arg0: i32) -> (i32, i32) {
    %c0_i32 = arith.constant 0 : i32
    %c0_i32_0 = arith.constant 0 : i32
    %c0_i32_1 = arith.constant 0 : i32
    return %c0_i32, %c0_i32_0 : i32, i32
  }
  func.func @transform_18(%arg0: i32) -> (i32, i32, i32) {
    %c0_i32 = arith.constant 0 : i32
    %c0_i32_0 = arith.constant 0 : i32
    %c0_i32_1 = arith.constant 0 : i32
    return %arg0, %c0_i32, %c0_i32_0 : i32, i32, i32
  }
}

</mosaic_0001>

<llo_original>
// kernel: tpu_custom_call.1
$region0: #{tpu_custom_call.1}
  #allocation0 [shape = 'u32[]', space=smem, size = 0x4, offset = 0x4, fixed_abs, tag = 'smem constant byte address 0x4 - core index']
  #allocation1 [shape = 'u32[144,128]{1,0:T(1,128)}', space=vmem, size = 0x12000, scoped, tag = 'internal scratch']
  %s0 = inlined_call_operand.vmem [shape: f32[2,8,256], index: 0, kind: input, shape index: {}]
  %s1 = inlined_call_operand.vmem [shape: f32[8,8], index: 1, kind: input, shape index: {}]
  %s2 = inlined_call_operand.vmem [shape: f32[8,8], index: 2, kind: input, shape index: {}]
  %s3 = inlined_call_operand.vmem [shape: f32[8,1], index: 3, kind: input, shape index: {}]
  %s4 = inlined_call_operand.vmem [shape: f32[8,1], index: 4, kind: input, shape index: {}]
  %s5 = inlined_call_operand.vmem [shape: f32[16,72], index: 5, kind: input, shape index: {}]
  %s6 = inlined_call_operand.vmem [shape: f32[16,16], index: 6, kind: input, shape index: {}]
  %s7 = inlined_call_operand.vmem [shape: f32[16,1], index: 7, kind: input, shape index: {}]
  %s8 = inlined_call_operand.vmem [shape: f32[16,1], index: 8, kind: input, shape index: {}]
  %s9 = inlined_call_operand.vmem [shape: f32[3,256], index: 9, kind: input, shape index: {}]
  %s10 = inlined_call_operand.vmem [shape: f32[16,8], index: 10, kind: input, shape index: {}]
  %s11 = inlined_call_operand.vmem [shape: f32[16,1], index: 11, kind: input, shape index: {}]
  %s12 = inlined_call_operand.vmem [shape: f32[16,1], index: 12, kind: input, shape index: {}]
  %s13 = inlined_call_operand.vmem [shape: f32[16,1], index: 13, kind: input, shape index: {}]
  %s14 = inlined_call_operand.vmem [shape: f32[16,1], index: 14, kind: input, shape index: {}]
  %s15 = inlined_call_operand.vmem [shape: f32[16,1], index: 15, kind: input, shape index: {}]
  %s16 = inlined_call_operand.vmem [shape: f32[16,16], index: 16, kind: input, shape index: {}]
  %s17 = inlined_call_operand.vmem [shape: f32[16,1], index: 17, kind: input, shape index: {}]
  %s18 = inlined_call_operand.hbm [shape: f32[2,8,256], index: 18, kind: output, shape index: {}]
  %s19 = sld [smem:[#allocation0]]
  $region105: #{tpu_custom_call.1} parent=0
    _
  %s21 = ssub.s32 1, %s19
  %s22 = scalar_select 0, %s21, %s19
  $region1: #{tpu_custom_call.1} parent=0
    #allocation2 [shape = 'u8[16384]{0}', space=vmem, size = 0x4000, scoped, tag = 'output window, operand 0']
    #allocation3 [shape = 's32[2]{0}', space=sflag, size = 0x8, scoped, tag = 'scoped memory for tpu_custom_call.1']
    %23 = vsyncpa [#allocation3], 0
    %s24 = scalar_lea.sflag [#allocation3], 1
    %25 = vsyncpa %s24, 0
    loop: start=0, step=1, limit=4
    $region2: #{tpu_custom_call.1} parent=1 // loop_pre_header
      _
    $region3: #{tpu_custom_call.1} parent=1 // loop_header
      %s27 = sphi 0, %s31
      %p28 = scmp.ge.s32.totalorder %s27, 4
      %s37 = sphi 0, %s39
      %s40 = sphi 0, %s37
      %s41 = sphi 0, %s40
      %s57 = sphi 0, %s41
      %s61 = sphi 0, %s61
      %s63 = sphi 0, %s61
      %s64 = sphi 0, %s63
      %s78 = sphi 0, %s64
      %s82 = sphi 0, %s82
      %s84 = sphi 0, %s82
      %s85 = sphi 0, %s84
      %s99 = sphi 0, %s85
      %s103 = sphi 0, %s103
      %s105 = sphi 0, %s103
      %s106 = sphi 0, %s105
      %s120 = sphi 0, %s106
      %s124 = sphi 0, %s124
      %s126 = sphi 0, %s124
      %s127 = sphi 0, %s126
      %s141 = sphi 0, %s127
      %s145 = sphi 0, %s145
      %s147 = sphi 0, %s145
      %s148 = sphi 0, %s147
      %s162 = sphi 0, %s148
      %s166 = sphi 0, %s166
      %s168 = sphi 0, %s166
      %s169 = sphi 0, %s168
      %s183 = sphi 0, %s169
      %s187 = sphi 0, %s187
      %s189 = sphi 0, %s187
      %s190 = sphi 0, %s189
      %s204 = sphi 0, %s190
      %s208 = sphi 0, %s208
      %s210 = sphi 0, %s208
      %s211 = sphi 0, %s210
      %s225 = sphi 0, %s211
      %s229 = sphi 0, %s229
      %s231 = sphi 0, %s229
      %s232 = sphi 0, %s231
      %s246 = sphi 0, %s232
      %s250 = sphi 0, %s250
      %s252 = sphi 0, %s250
      %s253 = sphi 0, %s252
      %s267 = sphi 0, %s253
      %s271 = sphi 0, %s271
      %s273 = sphi 0, %s271
      %s274 = sphi 0, %s273
      %s288 = sphi 0, %s274
      %s292 = sphi 0, %s292
      %s294 = sphi 0, %s292
      %s295 = sphi 0, %s294
      %s309 = sphi 0, %s295
      %s313 = sphi 0, %s313
      %s315 = sphi 0, %s313
      %s316 = sphi 0, %s315
      %s330 = sphi 0, %s316
      %s334 = sphi 0, %s334
      %s336 = sphi 0, %s334
      %s337 = sphi 0, %s336
      %s351 = sphi 0, %s337
      %s355 = sphi 0, %s355
      %s357 = sphi 0, %s355
      %s358 = sphi 0, %s357
      %s372 = sphi 0, %s358
      %s376 = sphi 0, %s376
      %s378 = sphi 0, %s376
      %s379 = sphi 0, %s378
      %s393 = sphi 0, %s379
      %s397 = sphi 0, %s397
      %s399 = sphi 0, %s397
      %s400 = sphi 0, %s399
      %s414 = sphi 0, %s400
      %s420 = sphi 0, %s422
      %s423 = sphi 0, %s420
      %s424 = sphi 0, %s423
      %s440 = sphi 0, %s424
    $region4: #{tpu_custom_call.1} parent=1 // loop_header_branch
      %30 = sbr.rel (%p28) target = $region8
    $region5: #{tpu_custom_call.1} parent=1 // loop_body
      %s32 = ssub.s32 %s27, 1
      %s33 = ssub.s32 %s27, 2
      %s34 = sadd.s32 %s27, 1
      %s35 = ssub.s32 %s27, %s34
      %p36 = scmp.eq.s32.totalorder %s35, 0
      %s38 = sadd.s32 %s37, 1
      %s39 = scalar_select %p36, %s37, %s38
      %p42 = pneg %p36
      %p43 = scmp.eq.s32.totalorder %s27, 1
      %p44 = por %p42, %p43
      %p45 = scmp.ne.s32.totalorder %s37, %s40
      %p46 = scmp.eq.s32.totalorder %s27, 0
      %p47 = por %p45, %p46
      %p48 = scmp.ne.s32.totalorder %s37, %s40
      %p49 = scmp.eq.s32.totalorder %s32, 1
      %p50 = por %p48, %p49
      %p51 = scmp.ne.s32.totalorder %s40, %s41
      %p52 = scmp.eq.s32.totalorder %s32, 0
      %p53 = por %p51, %p52
      %p54 = scmp.ne.s32.totalorder %s40, %s41
      %p55 = scmp.eq.s32.totalorder %s33, 1
      %p56 = por %p54, %p55
      %p58 = scmp.ne.s32.totalorder %s41, %s57
      %p59 = scmp.eq.s32.totalorder %s33, 0
      %p60 = por %p58, %p59
      %s62 = sadd.s32 %s61, 1
      %p65 = scmp.eq.s32.totalorder %s27, 1
      %p66 = scmp.ne.s32.totalorder %s61, %s63
      %p67 = scmp.eq.s32.totalorder %s27, 0
      %p68 = por %p66, %p67
      %p69 = scmp.ne.s32.totalorder %s61, %s63
      %p70 = scmp.eq.s32.totalorder %s32, 1
      %p71 = por %p69, %p70
      %p72 = scmp.ne.s32.totalorder %s63, %s64
      %p73 = scmp.eq.s32.totalorder %s32, 0
      %p74 = por %p72, %p73
      %p75 = scmp.ne.s32.totalorder %s63, %s64
      %p76 = scmp.eq.s32.totalorder %s33, 1
      %p77 = por %p75, %p76
      %p79 = scmp.ne.s32.totalorder %s64, %s78
      %p80 = scmp.eq.s32.totalorder %s33, 0
      %p81 = por %p79, %p80
      %s83 = sadd.s32 %s82, 1
      %p86 = scmp.eq.s32.totalorder %s27, 1
      %p87 = scmp.ne.s32.totalorder %s82, %s84
      %p88 = scmp.eq.s32.totalorder %s27, 0
      %p89 = por %p87, %p88
      %p90 = scmp.ne.s32.totalorder %s82, %s84
      %p91 = scmp.eq.s32.totalorder %s32, 1
      %p92 = por %p90, %p91
      %p93 = scmp.ne.s32.totalorder %s84, %s85
      %p94 = scmp.eq.s32.totalorder %s32, 0
      %p95 = por %p93, %p94
      %p96 = scmp.ne.s32.totalorder %s84, %s85
      %p97 = scmp.eq.s32.totalorder %s33, 1
      %p98 = por %p96, %p97
      %p100 = scmp.ne.s32.totalorder %s85, %s99
      %p101 = scmp.eq.s32.totalorder %s33, 0
      %p102 = por %p100, %p101
      %s104 = sadd.s32 %s103, 1
      %p107 = scmp.eq.s32.totalorder %s27, 1
      %p108 = scmp.ne.s32.totalorder %s103, %s105
      %p109 = scmp.eq.s32.totalorder %s27, 0
      %p110 = por %p108, %p109
      %p111 = scmp.ne.s32.totalorder %s103, %s105
      %p112 = scmp.eq.s32.totalorder %s32, 1
      %p113 = por %p111, %p112
      %p114 = scmp.ne.s32.totalorder %s105, %s106
      %p115 = scmp.eq.s32.totalorder %s32, 0
      %p116 = por %p114, %p115
      %p117 = scmp.ne.s32.totalorder %s105, %s106
      %p118 = scmp.eq.s32.totalorder %s33, 1
      %p119 = por %p117, %p118
      %p121 = scmp.ne.s32.totalorder %s106, %s120
      %p122 = scmp.eq.s32.totalorder %s33, 0
      %p123 = por %p121, %p122
      %s125 = sadd.s32 %s124, 1
      %p128 = scmp.eq.s32.totalorder %s27, 1
      %p129 = scmp.ne.s32.totalorder %s124, %s126
      %p130 = scmp.eq.s32.totalorder %s27, 0
      %p131 = por %p129, %p130
      %p132 = scmp.ne.s32.totalorder %s124, %s126
      %p133 = scmp.eq.s32.totalorder %s32, 1
      %p134 = por %p132, %p133
      %p135 = scmp.ne.s32.totalorder %s126, %s127
      %p136 = scmp.eq.s32.totalorder %s32, 0
      %p137 = por %p135, %p136
      %p138 = scmp.ne.s32.totalorder %s126, %s127
      %p139 = scmp.eq.s32.totalorder %s33, 1
      %p140 = por %p138, %p139
      %p142 = scmp.ne.s32.totalorder %s127, %s141
      %p143 = scmp.eq.s32.totalorder %s33, 0
      %p144 = por %p142, %p143
      %s146 = sadd.s32 %s145, 1
      %p149 = scmp.eq.s32.totalorder %s27, 1
      %p150 = scmp.ne.s32.totalorder %s145, %s147
      %p151 = scmp.eq.s32.totalorder %s27, 0
      %p152 = por %p150, %p151
      %p153 = scmp.ne.s32.totalorder %s145, %s147
      %p154 = scmp.eq.s32.totalorder %s32, 1
      %p155 = por %p153, %p154
      %p156 = scmp.ne.s32.totalorder %s147, %s148
      %p157 = scmp.eq.s32.totalorder %s32, 0
      %p158 = por %p156, %p157
      %p159 = scmp.ne.s32.totalorder %s147, %s148
      %p160 = scmp.eq.s32.totalorder %s33, 1
      %p161 = por %p159, %p160
      %p163 = scmp.ne.s32.totalorder %s148, %s162
      %p164 = scmp.eq.s32.totalorder %s33, 0
      %p165 = por %p163, %p164
      %s167 = sadd.s32 %s166, 1
      %p170 = scmp.eq.s32.totalorder %s27, 1
      %p171 = scmp.ne.s32.totalorder %s166, %s168
      %p172 = scmp.eq.s32.totalorder %s27, 0
      %p173 = por %p171, %p172
      %p174 = scmp.ne.s32.totalorder %s166, %s168
      %p175 = scmp.eq.s32.totalorder %s32, 1
      %p176 = por %p174, %p175
      %p177 = scmp.ne.s32.totalorder %s168, %s169
      %p178 = scmp.eq.s32.totalorder %s32, 0
      %p179 = por %p177, %p178
      %p180 = scmp.ne.s32.totalorder %s168, %s169
      %p181 = scmp.eq.s32.totalorder %s33, 1
      %p182 = por %p180, %p181
      %p184 = scmp.ne.s32.totalorder %s169, %s183
      %p185 = scmp.eq.s32.totalorder %s33, 0
      %p186 = por %p184, %p185
      %s188 = sadd.s32 %s187, 1
      %p191 = scmp.eq.s32.totalorder %s27, 1
      %p192 = scmp.ne.s32.totalorder %s187, %s189
      %p193 = scmp.eq.s32.totalorder %s27, 0
      %p194 = por %p192, %p193
      %p195 = scmp.ne.s32.totalorder %s187, %s189
      %p196 = scmp.eq.s32.totalorder %s32, 1
      %p197 = por %p195, %p196
      %p198 = scmp.ne.s32.totalorder %s189, %s190
      %p199 = scmp.eq.s32.totalorder %s32, 0
      %p200 = por %p198, %p199
      %p201 = scmp.ne.s32.totalorder %s189, %s190
      %p202 = scmp.eq.s32.totalorder %s33, 1
      %p203 = por %p201, %p202
      %p205 = scmp.ne.s32.totalorder %s190, %s204
      %p206 = scmp.eq.s32.totalorder %s33, 0
      %p207 = por %p205, %p206
      %s209 = sadd.s32 %s208, 1
      %p212 = scmp.eq.s32.totalorder %s27, 1
      %p213 = scmp.ne.s32.totalorder %s208, %s210
      %p214 = scmp.eq.s32.totalorder %s27, 0
      %p215 = por %p213, %p214
      %p216 = scmp.ne.s32.totalorder %s208, %s210
      %p217 = scmp.eq.s32.totalorder %s32, 1
      %p218 = por %p216, %p217
      %p219 = scmp.ne.s32.totalorder %s210, %s211
      %p220 = scmp.eq.s32.totalorder %s32, 0
      %p221 = por %p219, %p220
      %p222 = scmp.ne.s32.totalorder %s210, %s211
      %p223 = scmp.eq.s32.totalorder %s33, 1
      %p224 = por %p222, %p223
      %p226 = scmp.ne.s32.totalorder %s211, %s225
      %p227 = scmp.eq.s32.totalorder %s33, 0
      %p228 = por %p226, %p227
      %s230 = sadd.s32 %s229, 1
      %p233 = scmp.eq.s32.totalorder %s27, 1
      %p234 = scmp.ne.s32.totalorder %s229, %s231
      %p235 = scmp.eq.s32.totalorder %s27, 0
      %p236 = por %p234, %p235
      %p237 = scmp.ne.s32.totalorder %s229, %s231
      %p238 = scmp.eq.s32.totalorder %s32, 1
      %p239 = por %p237, %p238
      %p240 = scmp.ne.s32.totalorder %s231, %s232
      %p241 = scmp.eq.s32.totalorder %s32, 0
      %p242 = por %p240, %p241
      %p243 = scmp.ne.s32.totalorder %s231, %s232
      %p244 = scmp.eq.s32.totalorder %s33, 1
      %p245 = por %p243, %p244
      %p247 = scmp.ne.s32.totalorder %s232, %s246
      %p248 = scmp.eq.s32.totalorder %s33, 0
      %p249 = por %p247, %p248
      %s251 = sadd.s32 %s250, 1
      %p254 = scmp.eq.s32.totalorder %s27, 1
      %p255 = scmp.ne.s32.totalorder %s250, %s252
      %p256 = scmp.eq.s32.totalorder %s27, 0
      %p257 = por %p255, %p256
      %p258 = scmp.ne.s32.totalorder %s250, %s252
      %p259 = scmp.eq.s32.totalorder %s32, 1
      %p260 = por %p258, %p259
      %p261 = scmp.ne.s32.totalorder %s252, %s253
      %p262 = scmp.eq.s32.totalorder %s32, 0
      %p263 = por %p261, %p262
      %p264 = scmp.ne.s32.totalorder %s252, %s253
      %p265 = scmp.eq.s32.totalorder %s33, 1
      %p266 = por %p264, %p265
      %p268 = scmp.ne.s32.totalorder %s253, %s267
      %p269 = scmp.eq.s32.totalorder %s33, 0
      %p270 = por %p268, %p269
      %s272 = sadd.s32 %s271, 1
      %p275 = scmp.eq.s32.totalorder %s27, 1
      %p276 = scmp.ne.s32.totalorder %s271, %s273
      %p277 = scmp.eq.s32.totalorder %s27, 0
      %p278 = por %p276, %p277
      %p279 = scmp.ne.s32.totalorder %s271, %s273
      %p280 = scmp.eq.s32.totalorder %s32, 1
      %p281 = por %p279, %p280
      %p282 = scmp.ne.s32.totalorder %s273, %s274
      %p283 = scmp.eq.s32.totalorder %s32, 0
      %p284 = por %p282, %p283
      %p285 = scmp.ne.s32.totalorder %s273, %s274
      %p286 = scmp.eq.s32.totalorder %s33, 1
      %p287 = por %p285, %p286
      %p289 = scmp.ne.s32.totalorder %s274, %s288
      %p290 = scmp.eq.s32.totalorder %s33, 0
      %p291 = por %p289, %p290
      %s293 = sadd.s32 %s292, 1
      %p296 = scmp.eq.s32.totalorder %s27, 1
      %p297 = scmp.ne.s32.totalorder %s292, %s294
      %p298 = scmp.eq.s32.totalorder %s27, 0
      %p299 = por %p297, %p298
      %p300 = scmp.ne.s32.totalorder %s292, %s294
      %p301 = scmp.eq.s32.totalorder %s32, 1
      %p302 = por %p300, %p301
      %p303 = scmp.ne.s32.totalorder %s294, %s295
      %p304 = scmp.eq.s32.totalorder %s32, 0
      %p305 = por %p303, %p304
      %p306 = scmp.ne.s32.totalorder %s294, %s295
      %p307 = scmp.eq.s32.totalorder %s33, 1
      %p308 = por %p306, %p307
      %p310 = scmp.ne.s32.totalorder %s295, %s309
      %p311 = scmp.eq.s32.totalorder %s33, 0
      %p312 = por %p310, %p311
      %s314 = sadd.s32 %s313, 1
      %p317 = scmp.eq.s32.totalorder %s27, 1
      %p318 = scmp.ne.s32.totalorder %s313, %s315
      %p319 = scmp.eq.s32.totalorder %s27, 0
      %p320 = por %p318, %p319
      %p321 = scmp.ne.s32.totalorder %s313, %s315
      %p322 = scmp.eq.s32.totalorder %s32, 1
      %p323 = por %p321, %p322
      %p324 = scmp.ne.s32.totalorder %s315, %s316
      %p325 = scmp.eq.s32.totalorder %s32, 0
      %p326 = por %p324, %p325
      %p327 = scmp.ne.s32.totalorder %s315, %s316
      %p328 = scmp.eq.s32.totalorder %s33, 1
      %p329 = por %p327, %p328
      %p331 = scmp.ne.s32.totalorder %s316, %s330
      %p332 = scmp.eq.s32.totalorder %s33, 0
      %p333 = por %p331, %p332
      %s335 = sadd.s32 %s334, 1
      %p338 = scmp.eq.s32.totalorder %s27, 1
      %p339 = scmp.ne.s32.totalorder %s334, %s336
      %p340 = scmp.eq.s32.totalorder %s27, 0
      %p341 = por %p339, %p340
      %p342 = scmp.ne.s32.totalorder %s334, %s336
      %p343 = scmp.eq.s32.totalorder %s32, 1
      %p344 = por %p342, %p343
      %p345 = scmp.ne.s32.totalorder %s336, %s337
      %p346 = scmp.eq.s32.totalorder %s32, 0
      %p347 = por %p345, %p346
      %p348 = scmp.ne.s32.totalorder %s336, %s337
      %p349 = scmp.eq.s32.totalorder %s33, 1
      %p350 = por %p348, %p349
      %p352 = scmp.ne.s32.totalorder %s337, %s351
      %p353 = scmp.eq.s32.totalorder %s33, 0
      %p354 = por %p352, %p353
      %s356 = sadd.s32 %s355, 1
      %p359 = scmp.eq.s32.totalorder %s27, 1
      %p360 = scmp.ne.s32.totalorder %s355, %s357
      %p361 = scmp.eq.s32.totalorder %s27, 0
      %p362 = por %p360, %p361
      %p363 = scmp.ne.s32.totalorder %s355, %s357
      %p364 = scmp.eq.s32.totalorder %s32, 1
      %p365 = por %p363, %p364
      %p366 = scmp.ne.s32.totalorder %s357, %s358
      %p367 = scmp.eq.s32.totalorder %s32, 0
      %p368 = por %p366, %p367
      %p369 = scmp.ne.s32.totalorder %s357, %s358
      %p370 = scmp.eq.s32.totalorder %s33, 1
      %p371 = por %p369, %p370
      %p373 = scmp.ne.s32.totalorder %s358, %s372
      %p374 = scmp.eq.s32.totalorder %s33, 0
      %p375 = por %p373, %p374
      %s377 = sadd.s32 %s376, 1
      %p380 = scmp.eq.s32.totalorder %s27, 1
      %p381 = scmp.ne.s32.totalorder %s376, %s378
      %p382 = scmp.eq.s32.totalorder %s27, 0
      %p383 = por %p381, %p382
      %p384 = scmp.ne.s32.totalorder %s376, %s378
      %p385 = scmp.eq.s32.totalorder %s32, 1
      %p386 = por %p384, %p385
      %p387 = scmp.ne.s32.totalorder %s378, %s379
      %p388 = scmp.eq.s32.totalorder %s32, 0
      %p389 = por %p387, %p388
      %p390 = scmp.ne.s32.totalorder %s378, %s379
      %p391 = scmp.eq.s32.totalorder %s33, 1
      %p392 = por %p390, %p391
      %p394 = scmp.ne.s32.totalorder %s379, %s393
      %p395 = scmp.eq.s32.totalorder %s33, 0
      %p396 = por %p394, %p395
      %s398 = sadd.s32 %s397, 1
      %p401 = scmp.eq.s32.totalorder %s27, 1
      %p402 = scmp.ne.s32.totalorder %s397, %s399
      %p403 = scmp.eq.s32.totalorder %s27, 0
      %p404 = por %p402, %p403
      %p405 = scmp.ne.s32.totalorder %s397, %s399
      %p406 = scmp.eq.s32.totalorder %s32, 1
      %p407 = por %p405, %p406
      %p408 = scmp.ne.s32.totalorder %s399, %s400
      %p409 = scmp.eq.s32.totalorder %s32, 0
      %p410 = por %p408, %p409
      %p411 = scmp.ne.s32.totalorder %s399, %s400
      %p412 = scmp.eq.s32.totalorder %s33, 1
      %p413 = por %p411, %p412
      %p415 = scmp.ne.s32.totalorder %s400, %s414
      %p416 = scmp.eq.s32.totalorder %s33, 0
      %p417 = por %p415, %p416
      %s418 = ssub.s32 %s27, %s34
      %p419 = scmp.eq.s32.totalorder %s418, 0
      %s421 = sadd.s32 %s420, 1
      %s422 = scalar_select %p419, %s420, %s421
      %p425 = pneg %p419
      %p426 = scmp.eq.s32.totalorder %s27, 1
      %p427 = por %p425, %p426
      %p428 = scmp.ne.s32.totalorder %s420, %s423
      %p429 = scmp.eq.s32.totalorder %s27, 0
      %p430 = por %p428, %p429
      %p431 = scmp.ne.s32.totalorder %s420, %s423
      %p432 = scmp.eq.s32.totalorder %s32, 1
      %p433 = por %p431, %p432
      %p434 = scmp.ne.s32.totalorder %s423, %s424
      %p435 = scmp.eq.s32.totalorder %s32, 0
      %p436 = por %p434, %p435
      %p437 = scmp.ne.s32.totalorder %s423, %s424
      %p438 = scmp.eq.s32.totalorder %s33, 1
      %p439 = por %p437, %p438
      %p441 = scmp.ne.s32.totalorder %s424, %s440
      %p442 = scmp.eq.s32.totalorder %s33, 0
      %p443 = por %p441, %p442
      %p444 = scmp.le.s32.totalorder 1, %s27
      %p445 = scmp.lt.s32.totalorder %s27, 3
      %p446 = pnand %p444, %p445
      %p447 = pneg %p446
      // Predicated region
      $region9: #{tpu_custom_call.1} parent=5 // pred_check
        _
      $region10: #{tpu_custom_call.1} parent=5 // pred_check_branch
        %449 = sbr.rel (%p446) target = $region12
      $region11: #{tpu_custom_call.1} parent=5 // pred_region
        %s450 = ssub.s32 %s27, 1
        // Predicated region
        $region13: #{tpu_custom_call.1} parent=11 // pred_check
          %p451 = pneg %p74
        $region14: #{tpu_custom_call.1} parent=11 // pred_check_branch
          %453 = sbr.rel (%p451) target = $region16
        $region15: #{tpu_custom_call.1} parent=11 // pred_region
          _
        $region16: #{tpu_custom_call.1} parent=11 // pred_fallthru
          _
        // Predicated region
        $region17: #{tpu_custom_call.1} parent=11 // pred_check
          %p454 = pneg %p95
        $region18: #{tpu_custom_call.1} parent=11 // pred_check_branch
          %456 = sbr.rel (%p454) target = $region20
        $region19: #{tpu_custom_call.1} parent=11 // pred_region
          _
        $region20: #{tpu_custom_call.1} parent=11 // pred_fallthru
          _
        // Predicated region
        $region21: #{tpu_custom_call.1} parent=11 // pred_check
          %p457 = pneg %p116
        $region22: #{tpu_custom_call.1} parent=11 // pred_check_branch
          %459 = sbr.rel (%p457) target = $region24
        $region23: #{tpu_custom_call.1} parent=11 // pred_region
          _
        $region24: #{tpu_custom_call.1} parent=11 // pred_fallthru
          _
        // Predicated region
        $region25: #{tpu_custom_call.1} parent=11 // pred_check
          %p460 = pneg %p137
        $region26: #{tpu_custom_call.1} parent=11 // pred_check_branch
          %462 = sbr.rel (%p460) target = $region28
        $region27: #{tpu_custom_call.1} parent=11 // pred_region
          _
        $region28: #{tpu_custom_call.1} parent=11 // pred_fallthru
          _
        // Predicated region
        $region29: #{tpu_custom_call.1} parent=11 // pred_check
          %p463 = pneg %p158
        $region30: #{tpu_custom_call.1} parent=11 // pred_check_branch
          %465 = sbr.rel (%p463) target = $region32
        $region31: #{tpu_custom_call.1} parent=11 // pred_region
          _
        $region32: #{tpu_custom_call.1} parent=11 // pred_fallthru
          _
        // Predicated region
        $region33: #{tpu_custom_call.1} parent=11 // pred_check
          %p466 = pneg %p179
        $region34: #{tpu_custom_call.1} parent=11 // pred_check_branch
          %468 = sbr.rel (%p466) target = $region36
        $region35: #{tpu_custom_call.1} parent=11 // pred_region
          _
        $region36: #{tpu_custom_call.1} parent=11 // pred_fallthru
          _
        // Predicated region
        $region37: #{tpu_custom_call.1} parent=11 // pred_check
          %p469 = pneg %p200
        $region38: #{tpu_custom_call.1} parent=11 // pred_check_branch
          %471 = sbr.rel (%p469) target = $region40
        $region39: #{tpu_custom_call.1} parent=11 // pred_region
          _
        $region40: #{tpu_custom_call.1} parent=11 // pred_fallthru
          _
        // Predicated region
        $region41: #{tpu_custom_call.1} parent=11 // pred_check
          %p472 = pneg %p221
        $region42: #{tpu_custom_call.1} parent=11 // pred_check_branch
          %474 = sbr.rel (%p472) target = $region44
        $region43: #{tpu_custom_call.1} parent=11 // pred_region
          _
        $region44: #{tpu_custom_call.1} parent=11 // pred_fallthru
          _
        // Predicated region
        $region45: #{tpu_custom_call.1} parent=11 // pred_check
          %p475 = pneg %p242
        $region46: #{tpu_custom_call.1} parent=11 // pred_check_branch
          %477 = sbr.rel (%p475) target = $region48
        $region47: #{tpu_custom_call.1} parent=11 // pred_region
          _
        $region48: #{tpu_custom_call.1} parent=11 // pred_fallthru
          _
        // Predicated region
        $region49: #{tpu_custom_call.1} parent=11 // pred_check
          %p478 = pneg %p263
        $region50: #{tpu_custom_call.1} parent=11 // pred_check_branch
          %480 = sbr.rel (%p478) target = $region52
        $region51: #{tpu_custom_call.1} parent=11 // pred_region
          _
        $region52: #{tpu_custom_call.1} parent=11 // pred_fallthru
          _
        // Predicated region
        $region53: #{tpu_custom_call.1} parent=11 // pred_check
          %p481 = pneg %p284
        $region54: #{tpu_custom_call.1} parent=11 // pred_check_branch
          %483 = sbr.rel (%p481) target = $region56
        $region55: #{tpu_custom_call.1} parent=11 // pred_region
          _
        $region56: #{tpu_custom_call.1} parent=11 // pred_fallthru
          _
        // Predicated region
        $region57: #{tpu_custom_call.1} parent=11 // pred_check
          %p484 = pneg %p305
        $region58: #{tpu_custom_call.1} parent=11 // pred_check_branch
          %486 = sbr.rel (%p484) target = $region60
        $region59: #{tpu_custom_call.1} parent=11 // pred_region
          _
        $region60: #{tpu_custom_call.1} parent=11 // pred_fallthru
          _
        // Predicated region
        $region61: #{tpu_custom_call.1} parent=11 // pred_check
          %p487 = pneg %p326
        $region62: #{tpu_custom_call.1} parent=11 // pred_check_branch
          %489 = sbr.rel (%p487) target = $region64
        $region63: #{tpu_custom_call.1} parent=11 // pred_region
          _
        $region64: #{tpu_custom_call.1} parent=11 // pred_fallthru
          _
        // Predicated region
        $region65: #{tpu_custom_call.1} parent=11 // pred_check
          %p490 = pneg %p347
        $region66: #{tpu_custom_call.1} parent=11 // pred_check_branch
          %492 = sbr.rel (%p490) target = $region68
        $region67: #{tpu_custom_call.1} parent=11 // pred_region
          _
        $region68: #{tpu_custom_call.1} parent=11 // pred_fallthru
          _
        // Predicated region
        $region69: #{tpu_custom_call.1} parent=11 // pred_check
          %p493 = pneg %p368
        $region70: #{tpu_custom_call.1} parent=11 // pred_check_branch
          %495 = sbr.rel (%p493) target = $region72
        $region71: #{tpu_custom_call.1} parent=11 // pred_region
          _
        $region72: #{tpu_custom_call.1} parent=11 // pred_fallthru
          _
        // Predicated region
        $region73: #{tpu_custom_call.1} parent=11 // pred_check
          %p496 = pneg %p389
        $region74: #{tpu_custom_call.1} parent=11 // pred_check_branch
          %498 = sbr.rel (%p496) target = $region76
        $region75: #{tpu_custom_call.1} parent=11 // pred_region
          _
        $region76: #{tpu_custom_call.1} parent=11 // pred_fallthru
          _
        // Predicated region
        $region77: #{tpu_custom_call.1} parent=11 // pred_check
          %p499 = pneg %p410
        $region78: #{tpu_custom_call.1} parent=11 // pred_check_branch
          %501 = sbr.rel (%p499) target = $region80
        $region79: #{tpu_custom_call.1} parent=11 // pred_region
          _
        $region80: #{tpu_custom_call.1} parent=11 // pred_fallthru
          _
      $region12: #{tpu_custom_call.1} parent=5 // pred_fallthru
        _
      %p502 = scmp.lt.s32.totalorder %s27, 2
      // Predicated region
      $region81: #{tpu_custom_call.1} parent=5 // pred_check
        %p503 = pneg %p502
      $region82: #{tpu_custom_call.1} parent=5 // pred_check_branch
        %505 = sbr.rel (%p503) target = $region84
      $region83: #{tpu_custom_call.1} parent=5 // pred_region
        // Predicated region
        $region85: #{tpu_custom_call.1} parent=83 // pred_check
          %p506 = pneg %p47
        $region86: #{tpu_custom_call.1} parent=83 // pred_check_branch
          %508 = sbr.rel (%p506) target = $region88
        $region87: #{tpu_custom_call.1} parent=83 // pred_region
          %p509 = scmp.lt.s32.totalorder %s27, 1
          %s510 = scalar_select %p509, %s27, 1
          %s511 = smul.addr %s510, 2
          %s512 = smul.addr %s511, 8
          %s513 = scalar_lea.vmem %s0, %s512
        $region88: #{tpu_custom_call.1} parent=83 // pred_fallthru
          _
      $region84: #{tpu_custom_call.1} parent=5 // pred_fallthru
        _
      %p514 = scmp.le.s32.totalorder 1, %s27
      %p515 = scmp.lt.s32.totalorder %s27, 3
      %p516 = pnand %p514, %p515
      %p517 = pneg %p516
      // Predicated region
      $region89: #{tpu_custom_call.1} parent=5 // pred_check
        _
      $region90: #{tpu_custom_call.1} parent=5 // pred_check_branch
        %519 = sbr.rel (%p516) target = $region92
      $region91: #{tpu_custom_call.1} parent=5 // pred_region
        %s520 = ssub.s32 %s27, 1
        %p521 = scmp.lt.s32.totalorder %s32, 1
        %s522 = scalar_select %p521, %s32, 1
        %s523 = smul.addr %s522, 2
        %s524 = smul.addr %s523, 8
        %s525 = scalar_lea.vmem %s0, %s524
        %p526 = pneg %p53
        %p527 = pneg %p50
        %p528 = pneg %p74
        %p529 = pneg %p71
        %p530 = pneg %p95
        %p531 = pneg %p92
        %p532 = pneg %p116
        %p533 = pneg %p113
        %p534 = pneg %p137
        %p535 = pneg %p134
        %p536 = pneg %p158
        %p537 = pneg %p155
        %p538 = pneg %p179
        %p539 = pneg %p176
        %p540 = pneg %p200
        %p541 = pneg %p197
        %p542 = pneg %p221
        %p543 = pneg %p218
        %p544 = pneg %p242
        %p545 = pneg %p239
        %p546 = pneg %p263
        %p547 = pneg %p260
        %p548 = pneg %p284
        %p549 = pneg %p281
        %p550 = pneg %p305
        %p551 = pneg %p302
        %p552 = pneg %p326
        %p553 = pneg %p323
        %p554 = pneg %p347
        %p555 = pneg %p344
        %p556 = pneg %p368
        %p557 = pneg %p365
        %p558 = pneg %p389
        %p559 = pneg %p386
        %p560 = pneg %p410
        %p561 = pneg %p407
        %p562 = pneg %p436
        %p563 = pneg %p433
        %s564 = sand.u32 %s423, 1
        %s565 = scalar_lea.sflag [#allocation3], %s564
        %s566 = sand.u32 %s423, 1
        %s567 = smul.addr %s566, 16
        %s568 = scalar_lea.vmem [#allocation2], %s567
        %p569 = scmp.lt.s32.totalorder %s32, 1
        %s570 = scalar_select %p569, %s32, 1
        %s571 = smul.addr %s570, 2
        %s572 = smul.addr %s571, 8
        %s573 = scalar_lea.vmem %s0, %s572
        %v574 = vld [vmem:[%s573] sm:$0xff]
        %v575 = vld [vmem:[%s573 + $0x8] sm:$0xff]
        %v576 = vld [vmem:[%s1] sm:$0xff]
        %vm577 = vcmask 64512
        %v579 = vsel %vm577, %v576, 0
        %581 = vmatprep.subr.mxu0 %v575
        %582 = vmatpush1.msra.mxu0 %v574
        %583 = vmatprep.subr.mxu0 0.0
        %584 = vmatpush1.msra.mxu0 0.0
        %585 = vmatprep.subr.mxu0 0.0
        %586 = vmatpush1.msra.mxu0 0.0
        %587 = vmatprep.subr.mxu0 0.0
        %588 = vmatpush1.msra.mxu0 0.0
        %589 = vmatprep.subr.mxu0 0.0
        %590 = vmatpush1.msra.mxu0 0.0
        %591 = vmatprep.subr.mxu0 0.0
        %592 = vmatpush1.msra.mxu0 0.0
        %593 = vmatprep.subr.mxu0 0.0
        %594 = vmatpush1.msra.mxu0 0.0
        %595 = vmatprep.subr.mxu0 0.0
        %596 = vmatpush1.msra.mxu0 0.0
        %597 = vmatprep.subr.mxu0 0.0
        %598 = vmatpush1.msra.mxu0 0.0
        %599 = vmatprep.subr.mxu0 0.0
        %600 = vmatpush1.msra.mxu0 0.0
        %601 = vmatprep.subr.mxu0 0.0
        %602 = vmatpush1.msra.mxu0 0.0
        %603 = vmatprep.subr.mxu0 0.0
        %604 = vmatpush1.msra.mxu0 0.0
        %605 = vmatprep.subr.mxu0 0.0
        %606 = vmatpush1.msra.mxu0 0.0
        %607 = vmatprep.subr.mxu0 0.0
        %608 = vmatpush1.msra.mxu0 0.0
        %609 = vmatprep.subr.mxu0 0.0
        %610 = vmatpush1.msra.mxu0 0.0
        %611 = vmatprep.subr.mxu0 0.0
        %612 = vmatpush1.msra.mxu0 0.0
        %613 = vmatprep.subr.mxu0 0.0
        %614 = vmatpush1.msra.mxu0 0.0
        %615 = vmatprep.subr.mxu0 0.0
        %616 = vmatpush1.msra.mxu0 0.0
        %617 = vmatprep.subr.mxu0 0.0
        %618 = vmatpush1.msra.mxu0 0.0
        %619 = vmatprep.subr.mxu0 0.0
        %620 = vmatpush1.msra.mxu0 0.0
        %621 = vmatprep.subr.mxu0 0.0
        %622 = vmatpush1.msra.mxu0 0.0
        %623 = vmatprep.subr.mxu0 0.0
        %624 = vmatpush1.msra.mxu0 0.0
        %625 = vmatprep.subr.mxu0 0.0
        %626 = vmatpush1.msra.mxu0 0.0
        %627 = vmatprep.subr.mxu0 0.0
        %628 = vmatpush1.msra.mxu0 0.0
        %629 = vmatprep.subr.mxu0 0.0
        %630 = vmatpush1.msra.mxu0 0.0
        %631 = vmatprep.subr.mxu0 0.0
        %632 = vmatpush1.msra.mxu0 0.0
        %633 = vmatprep.subr.mxu0 0.0
        %634 = vmatpush1.msra.mxu0 0.0
        %635 = vmatprep.subr.mxu0 0.0
        %636 = vmatpush1.msra.mxu0 0.0
        %637 = vmatprep.subr.mxu0 0.0
        %638 = vmatpush1.msra.mxu0 0.0
        %639 = vmatprep.subr.mxu0 0.0
        %640 = vmatpush1.msra.mxu0 0.0
        %641 = vmatprep.subr.mxu0 0.0
        %642 = vmatpush1.msra.mxu0 0.0
        %643 = vmatprep.subr.mxu0 0.0
        %644 = vmatpush1.msra.mxu0 0.0
        %645 = vmatprep.mubr.f32.mxu0 0.0
        %646 = vmatmul.mubr.f32.gmra.mrb[0].mxu0 %v579
        %v647 = vpop.f32.mrb[0].mxu0
        %v648 = vadd.f32 0.0, %v647
        %v649 = vpop.f32.mrb[0].mxu0
        %v650 = vadd.f32 0.0, %v649
        %651 = vdwg.mxu0
        %v652 = vld [vmem:[%s2] sm:$0xff]
        %v653 = vld [vmem:[%s3] sm:$0xff]
        %v654 = vld [vmem:[%s4] sm:$0xff]
        %v655 = vadd.f32 %v648, %v650
        %656 = vadd.xlane.f32.xlu0 %v655
        %v657 = vpop.xlane.xlu0 %656
        %v658 = vmul.f32 %v648, %v648
        %v659 = vmul.f32 %v650, %v650
        %v660 = vadd.f32 %v658, %v659
        %661 = vadd.xlane.f32.xlu0 %v660
        %v662 = vpop.xlane.xlu0 %661
        %v664 = vsel %vm577, %v652, 0
        %666 = vmatprep.subr.mxu0 0.0
        %667 = vmatpush1.msra.mxu0 %v657
        %668 = vmatprep.subr.mxu0 0.0
        %669 = vmatpush1.msra.mxu0 0.0
        %670 = vmatprep.subr.mxu0 0.0
        %671 = vmatpush1.msra.mxu0 0.0
        %672 = vmatprep.subr.mxu0 0.0
        %673 = vmatpush1.msra.mxu0 0.0
        %674 = vmatprep.subr.mxu0 0.0
        %675 = vmatpush1.msra.mxu0 0.0
        %676 = vmatprep.subr.mxu0 0.0
        %677 = vmatpush1.msra.mxu0 0.0
        %678 = vmatprep.subr.mxu0 0.0
        %679 = vmatpush1.msra.mxu0 0.0
        %680 = vmatprep.subr.mxu0 0.0
        %681 = vmatpush1.msra.mxu0 0.0
        %682 = vmatprep.subr.mxu0 0.0
        %683 = vmatpush1.msra.mxu0 0.0
        %684 = vmatprep.subr.mxu0 0.0
        %685 = vmatpush1.msra.mxu0 0.0
        %686 = vmatprep.subr.mxu0 0.0
        %687 = vmatpush1.msra.mxu0 0.0
        %688 = vmatprep.subr.mxu0 0.0
        %689 = vmatpush1.msra.mxu0 0.0
        %690 = vmatprep.subr.mxu0 0.0
        %691 = vmatpush1.msra.mxu0 0.0
        %692 = vmatprep.subr.mxu0 0.0
        %693 = vmatpush1.msra.mxu0 0.0
        %694 = vmatprep.subr.mxu0 0.0
        %695 = vmatpush1.msra.mxu0 0.0
        %696 = vmatprep.subr.mxu0 0.0
        %697 = vmatpush1.msra.mxu0 0.0
        %698 = vmatprep.subr.mxu0 0.0
        %699 = vmatpush1.msra.mxu0 0.0
        %700 = vmatprep.subr.mxu0 0.0
        %701 = vmatpush1.msra.mxu0 0.0
        %702 = vmatprep.subr.mxu0 0.0
        %703 = vmatpush1.msra.mxu0 0.0
        %704 = vmatprep.subr.mxu0 0.0
        %705 = vmatpush1.msra.mxu0 0.0
        %706 = vmatprep.subr.mxu0 0.0
        %707 = vmatpush1.msra.mxu0 0.0
        %708 = vmatprep.subr.mxu0 0.0
        %709 = vmatpush1.msra.mxu0 0.0
        %710 = vmatprep.subr.mxu0 0.0
        %711 = vmatpush1.msra.mxu0 0.0
        %712 = vmatprep.subr.mxu0 0.0
        %713 = vmatpush1.msra.mxu0 0.0
        %714 = vmatprep.subr.mxu0 0.0
        %715 = vmatpush1.msra.mxu0 0.0
        %716 = vmatprep.subr.mxu0 0.0
        %717 = vmatpush1.msra.mxu0 0.0
        %718 = vmatprep.subr.mxu0 0.0
        %719 = vmatpush1.msra.mxu0 0.0
        %720 = vmatprep.subr.mxu0 0.0
        %721 = vmatpush1.msra.mxu0 0.0
        %722 = vmatprep.subr.mxu0 0.0
        %723 = vmatpush1.msra.mxu0 0.0
        %724 = vmatprep.subr.mxu0 0.0
        %725 = vmatpush1.msra.mxu0 0.0
        %726 = vmatprep.subr.mxu0 0.0
        %727 = vmatpush1.msra.mxu0 0.0
        %728 = vmatprep.subr.mxu0 0.0
        %729 = vmatpush1.msra.mxu0 0.0
        %730 = vmatprep.mubr.f32.mxu0 0.0
        %731 = vmatmul.mubr.f32.gmra.mrb[0].mxu0 %v664
        %v732 = vpop.f32.mrb[0].mxu0
        %v733 = vadd.f32 0.0, %v732
        %v734 = vpop.f32.mrb[0].mxu0
        %735 = vdwg.mxu0
        %736 = vmatprep.subr.mxu0 0.0
        %737 = vmatpush1.msra.mxu0 %v662
        %738 = vmatprep.subr.mxu0 0.0
        %739 = vmatpush1.msra.mxu0 0.0
        %740 = vmatprep.subr.mxu0 0.0
        %741 = vmatpush1.msra.mxu0 0.0
        %742 = vmatprep.subr.mxu0 0.0
        %743 = vmatpush1.msra.mxu0 0.0
        %744 = vmatprep.subr.mxu0 0.0
        %745 = vmatpush1.msra.mxu0 0.0
        %746 = vmatprep.subr.mxu0 0.0
        %747 = vmatpush1.msra.mxu0 0.0
        %748 = vmatprep.subr.mxu0 0.0
        %749 = vmatpush1.msra.mxu0 0.0
        %750 = vmatprep.subr.mxu0 0.0
        %751 = vmatpush1.msra.mxu0 0.0
        %752 = vmatprep.subr.mxu0 0.0
        %753 = vmatpush1.msra.mxu0 0.0
        %754 = vmatprep.subr.mxu0 0.0
        %755 = vmatpush1.msra.mxu0 0.0
        %756 = vmatprep.subr.mxu0 0.0
        %757 = vmatpush1.msra.mxu0 0.0
        %758 = vmatprep.subr.mxu0 0.0
        %759 = vmatpush1.msra.mxu0 0.0
        %760 = vmatprep.subr.mxu0 0.0
        %761 = vmatpush1.msra.mxu0 0.0
        %762 = vmatprep.subr.mxu0 0.0
        %763 = vmatpush1.msra.mxu0 0.0
        %764 = vmatprep.subr.mxu0 0.0
        %765 = vmatpush1.msra.mxu0 0.0
        %766 = vmatprep.subr.mxu0 0.0
        %767 = vmatpush1.msra.mxu0 0.0
        %768 = vmatprep.subr.mxu0 0.0
        %769 = vmatpush1.msra.mxu0 0.0
        %770 = vmatprep.subr.mxu0 0.0
        %771 = vmatpush1.msra.mxu0 0.0
        %772 = vmatprep.subr.mxu0 0.0
        %773 = vmatpush1.msra.mxu0 0.0
        %774 = vmatprep.subr.mxu0 0.0
        %775 = vmatpush1.msra.mxu0 0.0
        %776 = vmatprep.subr.mxu0 0.0
        %777 = vmatpush1.msra.mxu0 0.0
        %778 = vmatprep.subr.mxu0 0.0
        %779 = vmatpush1.msra.mxu0 0.0
        %780 = vmatprep.subr.mxu0 0.0
        %781 = vmatpush1.msra.mxu0 0.0
        %782 = vmatprep.subr.mxu0 0.0
        %783 = vmatpush1.msra.mxu0 0.0
        %784 = vmatprep.subr.mxu0 0.0
        %785 = vmatpush1.msra.mxu0 0.0
        %786 = vmatprep.subr.mxu0 0.0
        %787 = vmatpush1.msra.mxu0 0.0
        %788 = vmatprep.subr.mxu0 0.0
        %789 = vmatpush1.msra.mxu0 0.0
        %790 = vmatprep.subr.mxu0 0.0
        %791 = vmatpush1.msra.mxu0 0.0
        %792 = vmatprep.subr.mxu0 0.0
        %793 = vmatpush1.msra.mxu0 0.0
        %794 = vmatprep.subr.mxu0 0.0
        %795 = vmatpush1.msra.mxu0 0.0
        %796 = vmatprep.subr.mxu0 0.0
        %797 = vmatpush1.msra.mxu0 0.0
        %798 = vmatprep.subr.mxu0 0.0
        %799 = vmatpush1.msra.mxu0 0.0
        %800 = vmatprep.mubr.f32.mxu0 0.0
        %801 = vmatmul.mubr.f32.gmra.mrb[0].mxu0 %v664
        %v802 = vpop.f32.mrb[0].mxu0
        %v803 = vadd.f32 0.0, %v802
        %v804 = vpop.f32.mrb[0].mxu0
        %805 = vdwg.mxu0
        %v806 = vmul.f32 %v733, %v733
        %v807 = vsub.f32 %v803, %v806
        %v808 = vmax.f32 %v807, 0.0
        %v809 = vadd.f32 %v808, 0.001
        %v810 = vrsqrt.pop %v809
        %v811 = vmul.f32 %v653, %v810
        %v812 = vmul.f32 %v733, %v811
        %v813 = vsub.f32 %v654, %v812
        %815 = vset.pattern.permute.xlu0 0
        %816 = vperm.xlu0 %815, %v811
        %v817 = vpop.permute.xlu0 %816
        %v819 = vmul.f32 %v648, %v817
        %v820 = vmul.f32 %v650, %v817
        %822 = vset.pattern.permute.xlu0 0
        %823 = vperm.xlu0 %822, %v813
        %v824 = vpop.permute.xlu0 %823
        %v826 = vadd.f32 %v819, %v824
        %v827 = vadd.f32 %v820, %v824
        %v828 = vmin.f32 %v826, 20.0
        %v829 = vmin.f32 %v827, 20.0
        %v830 = vmul.f32 %v828, 1.442695
        %v831 = vpow.pop %v830
        %v832 = vmul.f32 %v829, 1.442695
        %v833 = vpow.pop %v832
        %v834 = vadd.f32 %v831, 1.0
        %v835 = vadd.f32 %v833, 1.0
        %v836 = vmul.f32 %v834, %v834
        %v837 = vmul.f32 %v835, %v835
        %v838 = vsub.f32 %v836, 1.0
        %v839 = vsub.f32 %v837, 1.0
        %v840 = vmul.f32 %v826, %v838
        %v841 = vmul.f32 %v827, %v839
        %v842 = vadd.f32 %v836, 1.0
        %v843 = vadd.f32 %v837, 1.0
        %v844 = vrcp.pop %v842
        %v845 = vmul.f32 %v840, %v844
        %v846 = vrcp.pop %v843
        %v847 = vmul.f32 %v841, %v846
        %850 = vrot.lane.b32.xlu0 %v845, 17
        %v851 = vpop.permute.xlu0 %850
        %852 = vrot.lane.b32.xlu0 %v847, 17
        %v853 = vpop.permute.xlu0 %852
        %vm854 = vcmask 138240
        %v855 = vsel %vm854, %v851, %v853
        %v859 = vsel %vm854, 0.0, %v851
        %v860 = vsel %vm854, %v853, 0.0
        %v861 = vld [vmem:[%s9] ss:$4 sm:$0x3]
        %v863 = vlaneseq
        %v864 = vshrl.u32 %v863, 7
        %v865 = vsub.s32 0, %v864
        %v866 = vrot.slane %v861, %v865
        %v867 = vlaneseq
        %v868 = vshrl.u32 %v867, 7
        %v869 = vsub.s32 1, %v868
        %v870 = vrot.slane %v861, %v869
        %v873 = vmul.f32 %v859, %v866
        %v874 = vmul.f32 %v855, %v870
        %s875 = scalar_lea.vmem %s9, 2
        %v876 = vld [vmem:[%s875] ss:$4 sm:$0x3]
        %v878 = vlaneseq
        %v879 = vshrl.u32 %v878, 7
        %v880 = vsub.s32 0, %v879
        %v881 = vrot.slane %v876, %v880
        %v882 = vlaneseq
        %v883 = vshrl.u32 %v882, 7
        %v884 = vsub.s32 1, %v883
        %v885 = vrot.slane %v876, %v884
        %886 = vrot.lane.b32.xlu0 %v881, 2
        %v887 = vpop.permute.xlu0 %886
        %888 = vrot.lane.b32.xlu0 %v885, 2
        %v889 = vpop.permute.xlu0 %888
        %vm890 = vcmask 15360
        %v891 = vsel %vm890, %v887, %v889
        %v895 = vmul.f32 %v859, %v887
        %v896 = vmul.f32 %v855, %v891
        %v897 = vmul.f32 %v860, %v889
        %898 = vrot.lane.b32.xlu0 %v866, 16
        %v899 = vpop.permute.xlu0 %898
        %900 = vrot.lane.b32.xlu0 %v870, 16
        %v901 = vpop.permute.xlu0 %900
        %vm902 = vcmask 130048
        %v903 = vsel %vm902, %v899, %v901
        %v907 = vmul.f32 %v859, %v899
        %v908 = vmul.f32 %v855, %v903
        %v909 = vmul.f32 %v860, %v901
        %910 = vrot.lane.b32.xlu0 %v881, 18
        %v911 = vpop.permute.xlu0 %910
        %912 = vrot.lane.b32.xlu0 %v885, 18
        %v913 = vpop.permute.xlu0 %912
        %vm914 = vcmask 146432
        %v915 = vsel %vm914, %v911, %v913
        %v919 = vmul.f32 %v859, %v911
        %v920 = vmul.f32 %v855, %v915
        %v921 = vmul.f32 %v860, %v913
        %922 = vrot.lane.b32.xlu0 %v866, 32
        %v923 = vpop.permute.xlu0 %922
        %924 = vrot.lane.b32.xlu0 %v870, 32
        %v925 = vpop.permute.xlu0 %924
        %vm926 = vcmask 261120
        %v927 = vsel %vm926, %v923, %v925
        %v931 = vmul.f32 %v859, %v923
        %v932 = vmul.f32 %v855, %v927
        %v933 = vmul.f32 %v860, %v925
        %934 = vrot.lane.b32.xlu0 %v881, 34
        %v935 = vpop.permute.xlu0 %934
        %936 = vrot.lane.b32.xlu0 %v885, 34
        %v937 = vpop.permute.xlu0 %936
        %vm938 = vcmask 277504
        %v939 = vsel %vm938, %v935, %v937
        %v943 = vmul.f32 %v859, %v935
        %v944 = vmul.f32 %v855, %v939
        %v945 = vmul.f32 %v860, %v937
        %948 = vrot.lane.b32.xlu0 %v859, 127
        %v949 = vpop.permute.xlu0 %948
        %950 = vrot.lane.b32.xlu0 %v855, 127
        %v951 = vpop.permute.xlu0 %950
        %952 = vrot.lane.b32.xlu0 %v860, 127
        %v953 = vpop.permute.xlu0 %952
        %vm954 = vcmask 1039360
        %v955 = vsel %vm954, %v949, %v951
        %v956 = vsel %vm954, %v951, %v953
        %962 = vrot.lane.b32.xlu0 %v895, 126
        %v963 = vpop.permute.xlu0 %962
        %964 = vrot.lane.b32.xlu0 %v896, 126
        %v965 = vpop.permute.xlu0 %964
        %966 = vrot.lane.b32.xlu0 %v897, 126
        %v967 = vpop.permute.xlu0 %966
        %vm968 = vcmask 1031168
        %v969 = vsel %vm968, %v963, %v965
        %v970 = vsel %vm968, %v965, %v967
        %976 = vrot.lane.b32.xlu0 %v907, 112
        %v977 = vpop.permute.xlu0 %976
        %978 = vrot.lane.b32.xlu0 %v908, 112
        %v979 = vpop.permute.xlu0 %978
        %980 = vrot.lane.b32.xlu0 %v909, 112
        %v981 = vpop.permute.xlu0 %980
        %vm982 = vcmask 916480
        %v983 = vsel %vm982, %v977, %v979
        %v984 = vsel %vm982, %v979, %v981
        %987 = vrot.lane.b32.xlu0 %v859, 111
        %v988 = vpop.permute.xlu0 %987
        %989 = vrot.lane.b32.xlu0 %v855, 111
        %v990 = vpop.permute.xlu0 %989
        %991 = vrot.lane.b32.xlu0 %v860, 111
        %v992 = vpop.permute.xlu0 %991
        %vm993 = vcmask 908288
        %v994 = vsel %vm993, %v988, %v990
        %v995 = vsel %vm993, %v990, %v992
        %1001 = vrot.lane.b32.xlu0 %v919, 110
        %v1002 = vpop.permute.xlu0 %1001
        %1003 = vrot.lane.b32.xlu0 %v920, 110
        %v1004 = vpop.permute.xlu0 %1003
        %1005 = vrot.lane.b32.xlu0 %v921, 110
        %v1006 = vpop.permute.xlu0 %1005
        %vm1007 = vcmask 900096
        %v1008 = vsel %vm1007, %v1002, %v1004
        %v1009 = vsel %vm1007, %v1004, %v1006
        %1015 = vrot.lane.b32.xlu0 %v931, 96
        %v1016 = vpop.permute.xlu0 %1015
        %1017 = vrot.lane.b32.xlu0 %v932, 96
        %v1018 = vpop.permute.xlu0 %1017
        %1019 = vrot.lane.b32.xlu0 %v933, 96
        %v1020 = vpop.permute.xlu0 %1019
        %vm1021 = vcmask 785408
        %v1022 = vsel %vm1021, %v1016, %v1018
        %v1023 = vsel %vm1021, %v1018, %v1020
        %1026 = vrot.lane.b32.xlu0 %v859, 95
        %v1027 = vpop.permute.xlu0 %1026
        %1028 = vrot.lane.b32.xlu0 %v855, 95
        %v1029 = vpop.permute.xlu0 %1028
        %1030 = vrot.lane.b32.xlu0 %v860, 95
        %v1031 = vpop.permute.xlu0 %1030
        %vm1032 = vcmask 777216
        %v1033 = vsel %vm1032, %v1027, %v1029
        %v1034 = vsel %vm1032, %v1029, %v1031
        %1040 = vrot.lane.b32.xlu0 %v943, 94
        %v1041 = vpop.permute.xlu0 %1040
        %1042 = vrot.lane.b32.xlu0 %v944, 94
        %v1043 = vpop.permute.xlu0 %1042
        %1044 = vrot.lane.b32.xlu0 %v945, 94
        %v1045 = vpop.permute.xlu0 %1044
        %vm1046 = vcmask 769024
        %v1047 = vsel %vm1046, %v1041, %v1043
        %v1048 = vsel %vm1046, %v1043, %v1045
        %v1051 = vld [vmem:[%s5] sm:$0xff]
        %v1052 = vld [vmem:[%s5 + $0x8] sm:$0xff]
        %vm1053 = vcmask 588800
        %v1055 = vsel %vm1053, %v1051, 0
        %v1058 = vsel %vm1053, %v1052, 0
        %1060 = vmatprep.subr.mxu0 %v874
        %1061 = vmatpush1.msra.mxu0 %v873
        %1062 = vmatprep.subr.mxu0 %v956
        %1063 = vmatpush1.msra.mxu0 %v955
        %1064 = vmatprep.subr.mxu0 %v970
        %1065 = vmatpush1.msra.mxu0 %v969
        %1066 = vmatprep.subr.mxu0 %v984
        %1067 = vmatpush1.msra.mxu0 %v983
        %1068 = vmatprep.subr.mxu0 %v995
        %1069 = vmatpush1.msra.mxu0 %v994
        %1070 = vmatprep.subr.mxu0 %v1009
        %1071 = vmatpush1.msra.mxu0 %v1008
        %1072 = vmatprep.subr.mxu0 %v1023
        %1073 = vmatpush1.msra.mxu0 %v1022
        %1074 = vmatprep.subr.mxu0 %v1034
        %1075 = vmatpush1.msra.mxu0 %v1033
        %1076 = vmatprep.subr.mxu0 %v1048
        %1077 = vmatpush1.msra.mxu0 %v1047
        %1078 = vmatprep.subr.mxu0 0.0
        %1079 = vmatpush1.msra.mxu0 0.0
        %1080 = vmatprep.subr.mxu0 0.0
        %1081 = vmatpush1.msra.mxu0 0.0
        %1082 = vmatprep.subr.mxu0 0.0
        %1083 = vmatpush1.msra.mxu0 0.0
        %1084 = vmatprep.subr.mxu0 0.0
        %1085 = vmatpush1.msra.mxu0 0.0
        %1086 = vmatprep.subr.mxu0 0.0
        %1087 = vmatpush1.msra.mxu0 0.0
        %1088 = vmatprep.subr.mxu0 0.0
        %1089 = vmatpush1.msra.mxu0 0.0
        %1090 = vmatprep.subr.mxu0 0.0
        %1091 = vmatpush1.msra.mxu0 0.0
        %1092 = vmatprep.subr.mxu0 0.0
        %1093 = vmatpush1.msra.mxu0 0.0
        %1094 = vmatprep.subr.mxu0 0.0
        %1095 = vmatpush1.msra.mxu0 0.0
        %1096 = vmatprep.subr.mxu0 0.0
        %1097 = vmatpush1.msra.mxu0 0.0
        %1098 = vmatprep.subr.mxu0 0.0
        %1099 = vmatpush1.msra.mxu0 0.0
        %1100 = vmatprep.subr.mxu0 0.0
        %1101 = vmatpush1.msra.mxu0 0.0
        %1102 = vmatprep.subr.mxu0 0.0
        %1103 = vmatpush1.msra.mxu0 0.0
        %1104 = vmatprep.subr.mxu0 0.0
        %1105 = vmatpush1.msra.mxu0 0.0
        %1106 = vmatprep.subr.mxu0 0.0
        %1107 = vmatpush1.msra.mxu0 0.0
        %1108 = vmatprep.subr.mxu0 0.0
        %1109 = vmatpush1.msra.mxu0 0.0
        %1110 = vmatprep.subr.mxu0 0.0
        %1111 = vmatpush1.msra.mxu0 0.0
        %1112 = vmatprep.subr.mxu0 0.0
        %1113 = vmatpush1.msra.mxu0 0.0
        %1114 = vmatprep.subr.mxu0 0.0
        %1115 = vmatpush1.msra.mxu0 0.0
        %1116 = vmatprep.subr.mxu0 0.0
        %1117 = vmatpush1.msra.mxu0 0.0
        %1118 = vmatprep.subr.mxu0 0.0
        %1119 = vmatpush1.msra.mxu0 0.0
        %1120 = vmatprep.subr.mxu0 0.0
        %1121 = vmatpush1.msra.mxu0 0.0
        %1122 = vmatprep.subr.mxu0 0.0
        %1123 = vmatpush1.msra.mxu0 0.0
        %1124 = vmatprep.mubr.f32.mxu0 0.0
        %1125 = vmatmul.mubr.f32.gmra.mrb[0].mxu0 %v1055
        %v1126 = vpop.f32.mrb[0].mxu0
        %v1127 = vadd.f32 0.0, %v1126
        %v1128 = vpop.f32.mrb[0].mxu0
        %v1129 = vadd.f32 0.0, %v1128
        %1130 = vmatprep.mubr.f32.mxu0 0.0
        %1131 = vmatmul.mubr.f32.gmra.mrb[0].mxu0 %v1058
        %v1132 = vpop.f32.mrb[0].mxu0
        %v1133 = vadd.f32 0.0, %v1132
        %v1134 = vpop.f32.mrb[0].mxu0
        %v1135 = vadd.f32 0.0, %v1134
        %1136 = vdwg.mxu0
        %v1137 = vld [vmem:[%s6] sm:$0xff]
        %v1138 = vld [vmem:[%s6 + $0x8] sm:$0xff]
        %v1139 = vld [vmem:[%s7] sm:$0xff]
        %v1140 = vld [vmem:[%s7 + $0x8] sm:$0xff]
        %v1141 = vld [vmem:[%s8] sm:$0xff]
        %v1142 = vld [vmem:[%s8 + $0x8] sm:$0xff]
        %v1143 = vadd.f32 %v1127, %v1129
        %1144 = vadd.xlane.f32.xlu0 %v1143
        %v1145 = vpop.xlane.xlu0 %1144
        %v1146 = vadd.f32 %v1133, %v1135
        %1147 = vadd.xlane.f32.xlu0 %v1146
        %v1148 = vpop.xlane.xlu0 %1147
        %v1149 = vmul.f32 %v1127, %v1127
        %v1150 = vmul.f32 %v1129, %v1129
        %v1151 = vmul.f32 %v1133, %v1133
        %v1152 = vmul.f32 %v1135, %v1135
        %v1153 = vadd.f32 %v1149, %v1150
        %1154 = vadd.xlane.f32.xlu0 %v1153
        %v1155 = vpop.xlane.xlu0 %1154
        %v1156 = vadd.f32 %v1151, %v1152
        %1157 = vadd.xlane.f32.xlu0 %v1156
        %v1158 = vpop.xlane.xlu0 %1157
        %v1160 = vsel %vm902, %v1137, 0
        %v1163 = vsel %vm902, %v1138, 0
        %1165 = vmatprep.subr.mxu0 0.0
        %1166 = vmatpush1.msra.mxu0 %v1145
        %1167 = vmatprep.subr.mxu0 0.0
        %1168 = vmatpush1.msra.mxu0 %v1148
        %1169 = vmatprep.subr.mxu0 0.0
        %1170 = vmatpush1.msra.mxu0 0.0
        %1171 = vmatprep.subr.mxu0 0.0
        %1172 = vmatpush1.msra.mxu0 0.0
        %1173 = vmatprep.subr.mxu0 0.0
        %1174 = vmatpush1.msra.mxu0 0.0
        %1175 = vmatprep.subr.mxu0 0.0
        %1176 = vmatpush1.msra.mxu0 0.0
        %1177 = vmatprep.subr.mxu0 0.0
        %1178 = vmatpush1.msra.mxu0 0.0
        %1179 = vmatprep.subr.mxu0 0.0
        %1180 = vmatpush1.msra.mxu0 0.0
        %1181 = vmatprep.subr.mxu0 0.0
        %1182 = vmatpush1.msra.mxu0 0.0
        %1183 = vmatprep.subr.mxu0 0.0
        %1184 = vmatpush1.msra.mxu0 0.0
        %1185 = vmatprep.subr.mxu0 0.0
        %1186 = vmatpush1.msra.mxu0 0.0
        %1187 = vmatprep.subr.mxu0 0.0
        %1188 = vmatpush1.msra.mxu0 0.0
        %1189 = vmatprep.subr.mxu0 0.0
        %1190 = vmatpush1.msra.mxu0 0.0
        %1191 = vmatprep.subr.mxu0 0.0
        %1192 = vmatpush1.msra.mxu0 0.0
        %1193 = vmatprep.subr.mxu0 0.0
        %1194 = vmatpush1.msra.mxu0 0.0
        %1195 = vmatprep.subr.mxu0 0.0
        %1196 = vmatpush1.msra.mxu0 0.0
        %1197 = vmatprep.subr.mxu0 0.0
        %1198 = vmatpush1.msra.mxu0 0.0
        %1199 = vmatprep.subr.mxu0 0.0
        %1200 = vmatpush1.msra.mxu0 0.0
        %1201 = vmatprep.subr.mxu0 0.0
        %1202 = vmatpush1.msra.mxu0 0.0
        %1203 = vmatprep.subr.mxu0 0.0
        %1204 = vmatpush1.msra.mxu0 0.0
        %1205 = vmatprep.subr.mxu0 0.0
        %1206 = vmatpush1.msra.mxu0 0.0
        %1207 = vmatprep.subr.mxu0 0.0
        %1208 = vmatpush1.msra.mxu0 0.0
        %1209 = vmatprep.subr.mxu0 0.0
        %1210 = vmatpush1.msra.mxu0 0.0
        %1211 = vmatprep.subr.mxu0 0.0
        %1212 = vmatpush1.msra.mxu0 0.0
        %1213 = vmatprep.subr.mxu0 0.0
        %1214 = vmatpush1.msra.mxu0 0.0
        %1215 = vmatprep.subr.mxu0 0.0
        %1216 = vmatpush1.msra.mxu0 0.0
        %1217 = vmatprep.subr.mxu0 0.0
        %1218 = vmatpush1.msra.mxu0 0.0
        %1219 = vmatprep.subr.mxu0 0.0
        %1220 = vmatpush1.msra.mxu0 0.0
        %1221 = vmatprep.subr.mxu0 0.0
        %1222 = vmatpush1.msra.mxu0 0.0
        %1223 = vmatprep.subr.mxu0 0.0
        %1224 = vmatpush1.msra.mxu0 0.0
        %1225 = vmatprep.subr.mxu0 0.0
        %1226 = vmatpush1.msra.mxu0 0.0
        %1227 = vmatprep.subr.mxu0 0.0
        %1228 = vmatpush1.msra.mxu0 0.0
        %1229 = vmatprep.mubr.f32.mxu0 0.0
        %1230 = vmatmul.mubr.f32.gmra.mrb[0].mxu0 %v1160
        %v1231 = vpop.f32.mrb[0].mxu0
        %v1232 = vadd.f32 0.0, %v1231
        %v1233 = vpop.f32.mrb[0].mxu0
        %1234 = vmatprep.mubr.f32.mxu0 0.0
        %1235 = vmatmul.mubr.f32.gmra.mrb[0].mxu0 %v1163
        %v1236 = vpop.f32.mrb[0].mxu0
        %v1237 = vadd.f32 0.0, %v1236
        %v1238 = vpop.f32.mrb[0].mxu0
        %1239 = vdwg.mxu0
        %1240 = vmatprep.subr.mxu0 0.0
        %1241 = vmatpush1.msra.mxu0 %v1155
        %1242 = vmatprep.subr.mxu0 0.0
        %1243 = vmatpush1.msra.mxu0 %v1158
        %1244 = vmatprep.subr.mxu0 0.0
        %1245 = vmatpush1.msra.mxu0 0.0
        %1246 = vmatprep.subr.mxu0 0.0
        %1247 = vmatpush1.msra.mxu0 0.0
        %1248 = vmatprep.subr.mxu0 0.0
        %1249 = vmatpush1.msra.mxu0 0.0
        %1250 = vmatprep.subr.mxu0 0.0
        %1251 = vmatpush1.msra.mxu0 0.0
        %1252 = vmatprep.subr.mxu0 0.0
        %1253 = vmatpush1.msra.mxu0 0.0
        %1254 = vmatprep.subr.mxu0 0.0
        %1255 = vmatpush1.msra.mxu0 0.0
        %1256 = vmatprep.subr.mxu0 0.0
        %1257 = vmatpush1.msra.mxu0 0.0
        %1258 = vmatprep.subr.mxu0 0.0
        %1259 = vmatpush1.msra.mxu0 0.0
        %1260 = vmatprep.subr.mxu0 0.0
        %1261 = vmatpush1.msra.mxu0 0.0
        %1262 = vmatprep.subr.mxu0 0.0
        %1263 = vmatpush1.msra.mxu0 0.0
        %1264 = vmatprep.subr.mxu0 0.0
        %1265 = vmatpush1.msra.mxu0 0.0
        %1266 = vmatprep.subr.mxu0 0.0
        %1267 = vmatpush1.msra.mxu0 0.0
        %1268 = vmatprep.subr.mxu0 0.0
        %1269 = vmatpush1.msra.mxu0 0.0
        %1270 = vmatprep.subr.mxu0 0.0
        %1271 = vmatpush1.msra.mxu0 0.0
        %1272 = vmatprep.subr.mxu0 0.0
        %1273 = vmatpush1.msra.mxu0 0.0
        %1274 = vmatprep.subr.mxu0 0.0
        %1275 = vmatpush1.msra.mxu0 0.0
        %1276 = vmatprep.subr.mxu0 0.0
        %1277 = vmatpush1.msra.mxu0 0.0
        %1278 = vmatprep.subr.mxu0 0.0
        %1279 = vmatpush1.msra.mxu0 0.0
        %1280 = vmatprep.subr.mxu0 0.0
        %1281 = vmatpush1.msra.mxu0 0.0
        %1282 = vmatprep.subr.mxu0 0.0
        %1283 = vmatpush1.msra.mxu0 0.0
        %1284 = vmatprep.subr.mxu0 0.0
        %1285 = vmatpush1.msra.mxu0 0.0
        %1286 = vmatprep.subr.mxu0 0.0
        %1287 = vmatpush1.msra.mxu0 0.0
        %1288 = vmatprep.subr.mxu0 0.0
        %1289 = vmatpush1.msra.mxu0 0.0
        %1290 = vmatprep.subr.mxu0 0.0
        %1291 = vmatpush1.msra.mxu0 0.0
        %1292 = vmatprep.subr.mxu0 0.0
        %1293 = vmatpush1.msra.mxu0 0.0
        %1294 = vmatprep.subr.mxu0 0.0
        %1295 = vmatpush1.msra.mxu0 0.0
        %1296 = vmatprep.subr.mxu0 0.0
        %1297 = vmatpush1.msra.mxu0 0.0
        %1298 = vmatprep.subr.mxu0 0.0
        %1299 = vmatpush1.msra.mxu0 0.0
        %1300 = vmatprep.subr.mxu0 0.0
        %1301 = vmatpush1.msra.mxu0 0.0
        %1302 = vmatprep.subr.mxu0 0.0
        %1303 = vmatpush1.msra.mxu0 0.0
        %1304 = vmatprep.mubr.f32.mxu0 0.0
        %1305 = vmatmul.mubr.f32.gmra.mrb[0].mxu0 %v1160
        %v1306 = vpop.f32.mrb[0].mxu0
        %v1307 = vadd.f32 0.0, %v1306
        %v1308 = vpop.f32.mrb[0].mxu0
        %1309 = vmatprep.mubr.f32.mxu0 0.0
        %1310 = vmatmul.mubr.f32.gmra.mrb[0].mxu0 %v1163
        %v1311 = vpop.f32.mrb[0].mxu0
        %v1312 = vadd.f32 0.0, %v1311
        %v1313 = vpop.f32.mrb[0].mxu0
        %1314 = vdwg.mxu0
        %v1315 = vmul.f32 %v1232, %v1232
        %v1316 = vmul.f32 %v1237, %v1237
        %v1317 = vsub.f32 %v1307, %v1315
        %v1318 = vsub.f32 %v1312, %v1316
        %v1319 = vmax.f32 %v1317, 0.0
        %v1320 = vmax.f32 %v1318, 0.0
        %v1321 = vadd.f32 %v1319, 0.001
        %v1322 = vadd.f32 %v1320, 0.001
        %v1323 = vrsqrt.pop %v1321
        %v1324 = vrsqrt.pop %v1322
        %v1325 = vmul.f32 %v1139, %v1323
        %v1326 = vmul.f32 %v1140, %v1324
        %v1327 = vmul.f32 %v1232, %v1325
        %v1328 = vmul.f32 %v1237, %v1326
        %v1329 = vsub.f32 %v1141, %v1327
        %v1330 = vsub.f32 %v1142, %v1328
        %1332 = vset.pattern.permute.xlu0 0
        %1333 = vperm.xlu0 %1332, %v1325
        %v1334 = vpop.permute.xlu0 %1333
        %1337 = vset.pattern.permute.xlu0 0
        %1338 = vperm.xlu0 %1337, %v1326
        %v1339 = vpop.permute.xlu0 %1338
        %v1341 = vmul.f32 %v1127, %v1334
        %v1342 = vmul.f32 %v1129, %v1334
        %v1343 = vmul.f32 %v1133, %v1339
        %v1344 = vmul.f32 %v1135, %v1339
        %1346 = vset.pattern.permute.xlu0 0
        %1347 = vperm.xlu0 %1346, %v1329
        %v1348 = vpop.permute.xlu0 %1347
        %1351 = vset.pattern.permute.xlu0 0
        %1352 = vperm.xlu0 %1351, %v1330
        %v1353 = vpop.permute.xlu0 %1352
        %v1355 = vadd.f32 %v1341, %v1348
        %v1356 = vadd.f32 %v1342, %v1348
        %v1357 = vadd.f32 %v1343, %v1353
        %v1358 = vadd.f32 %v1344, %v1353
        %v1359 = vmin.f32 %v1355, 20.0
        %v1360 = vmin.f32 %v1356, 20.0
        %v1361 = vmin.f32 %v1357, 20.0
        %v1362 = vmin.f32 %v1358, 20.0
        %v1363 = vmul.f32 %v1359, 1.442695
        %v1364 = vpow.pop %v1363
        %v1365 = vmul.f32 %v1360, 1.442695
        %v1366 = vpow.pop %v1365
        %v1367 = vmul.f32 %v1361, 1.442695
        %v1368 = vpow.pop %v1367
        %v1369 = vmul.f32 %v1362, 1.442695
        %v1370 = vpow.pop %v1369
        %v1371 = vadd.f32 %v1364, 1.0
        %v1372 = vadd.f32 %v1366, 1.0
        %v1373 = vadd.f32 %v1368, 1.0
        %v1374 = vadd.f32 %v1370, 1.0
        %v1375 = vmul.f32 %v1371, %v1371
        %v1376 = vmul.f32 %v1372, %v1372
        %v1377 = vmul.f32 %v1373, %v1373
        %v1378 = vmul.f32 %v1374, %v1374
        %v1379 = vsub.f32 %v1375, 1.0
        %v1380 = vsub.f32 %v1376, 1.0
        %v1381 = vsub.f32 %v1377, 1.0
        %v1382 = vsub.f32 %v1378, 1.0
        %v1383 = vmul.f32 %v1355, %v1379
        %v1384 = vmul.f32 %v1356, %v1380
        %v1385 = vmul.f32 %v1357, %v1381
        %v1386 = vmul.f32 %v1358, %v1382
        %v1387 = vadd.f32 %v1375, 1.0
        %v1388 = vadd.f32 %v1376, 1.0
        %v1389 = vadd.f32 %v1377, 1.0
        %v1390 = vadd.f32 %v1378, 1.0
        %v1391 = vrcp.pop %v1387
        %v1392 = vmul.f32 %v1383, %v1391
        %v1393 = vrcp.pop %v1388
        %v1394 = vmul.f32 %v1384, %v1393
        %v1395 = vrcp.pop %v1389
        %v1396 = vmul.f32 %v1385, %v1395
        %v1397 = vrcp.pop %v1390
        %v1398 = vmul.f32 %v1386, %v1397
        %v1399 = vadd.f32 %v1392, %v1396
        %v1400 = vadd.f32 %v1394, %v1398
        %v1401 = vadd.f32 %v1399, %v1400
        %1402 = vadd.xlane.f32.xlu0 %v1401
        %v1403 = vpop.xlane.xlu0 %1402
        %v1404 = vmul.f32 %v1403, 0.00390625
        %v1405 = vld [vmem:[%s10] sm:$0xff]
        %v1406 = vld [vmem:[%s10 + $0x8] sm:$0xff]
        %v1407 = vld [vmem:[%s11] sm:$0xff]
        %v1408 = vld [vmem:[%s11 + $0x8] sm:$0xff]
        %v1410 = vsel %vm577, %v1405, 0
        %v1413 = vsel %vm577, %v1406, 0
        %1415 = vmatprep.subr.mxu0 0.0
        %1416 = vmatpush1.msra.mxu0 %v1404
        %1417 = vmatprep.subr.mxu0 0.0
        %1418 = vmatpush1.msra.mxu0 0.0
        %1419 = vmatprep.subr.mxu0 0.0
        %1420 = vmatpush1.msra.mxu0 0.0
        %1421 = vmatprep.subr.mxu0 0.0
        %1422 = vmatpush1.msra.mxu0 0.0
        %1423 = vmatprep.subr.mxu0 0.0
        %1424 = vmatpush1.msra.mxu0 0.0
        %1425 = vmatprep.subr.mxu0 0.0
        %1426 = vmatpush1.msra.mxu0 0.0
        %1427 = vmatprep.subr.mxu0 0.0
        %1428 = vmatpush1.msra.mxu0 0.0
        %1429 = vmatprep.subr.mxu0 0.0
        %1430 = vmatpush1.msra.mxu0 0.0
        %1431 = vmatprep.subr.mxu0 0.0
        %1432 = vmatpush1.msra.mxu0 0.0
        %1433 = vmatprep.subr.mxu0 0.0
        %1434 = vmatpush1.msra.mxu0 0.0
        %1435 = vmatprep.subr.mxu0 0.0
        %1436 = vmatpush1.msra.mxu0 0.0
        %1437 = vmatprep.subr.mxu0 0.0
        %1438 = vmatpush1.msra.mxu0 0.0
        %1439 = vmatprep.subr.mxu0 0.0
        %1440 = vmatpush1.msra.mxu0 0.0
        %1441 = vmatprep.subr.mxu0 0.0
        %1442 = vmatpush1.msra.mxu0 0.0
        %1443 = vmatprep.subr.mxu0 0.0
        %1444 = vmatpush1.msra.mxu0 0.0
        %1445 = vmatprep.subr.mxu0 0.0
        %1446 = vmatpush1.msra.mxu0 0.0
        %1447 = vmatprep.subr.mxu0 0.0
        %1448 = vmatpush1.msra.mxu0 0.0
        %1449 = vmatprep.subr.mxu0 0.0
        %1450 = vmatpush1.msra.mxu0 0.0
        %1451 = vmatprep.subr.mxu0 0.0
        %1452 = vmatpush1.msra.mxu0 0.0
        %1453 = vmatprep.subr.mxu0 0.0
        %1454 = vmatpush1.msra.mxu0 0.0
        %1455 = vmatprep.subr.mxu0 0.0
        %1456 = vmatpush1.msra.mxu0 0.0
        %1457 = vmatprep.subr.mxu0 0.0
        %1458 = vmatpush1.msra.mxu0 0.0
        %1459 = vmatprep.subr.mxu0 0.0
        %1460 = vmatpush1.msra.mxu0 0.0
        %1461 = vmatprep.subr.mxu0 0.0
        %1462 = vmatpush1.msra.mxu0 0.0
        %1463 = vmatprep.subr.mxu0 0.0
        %1464 = vmatpush1.msra.mxu0 0.0
        %1465 = vmatprep.subr.mxu0 0.0
        %1466 = vmatpush1.msra.mxu0 0.0
        %1467 = vmatprep.subr.mxu0 0.0
        %1468 = vmatpush1.msra.mxu0 0.0
        %1469 = vmatprep.subr.mxu0 0.0
        %1470 = vmatpush1.msra.mxu0 0.0
        %1471 = vmatprep.subr.mxu0 0.0
        %1472 = vmatpush1.msra.mxu0 0.0
        %1473 = vmatprep.subr.mxu0 0.0
        %1474 = vmatpush1.msra.mxu0 0.0
        %1475 = vmatprep.subr.mxu0 0.0
        %1476 = vmatpush1.msra.mxu0 0.0
        %1477 = vmatprep.subr.mxu0 0.0
        %1478 = vmatpush1.msra.mxu0 0.0
        %1479 = vmatprep.mubr.f32.mxu0 0.0
        %1480 = vmatmul.mubr.f32.gmra.mrb[0].mxu0 %v1410
        %v1481 = vpop.f32.mrb[0].mxu0
        %v1482 = vadd.f32 %v1407, %v1481
        %v1483 = vpop.f32.mrb[0].mxu0
        %1484 = vmatprep.mubr.f32.mxu0 0.0
        %1485 = vmatmul.mubr.f32.gmra.mrb[0].mxu0 %v1413
        %v1486 = vpop.f32.mrb[0].mxu0
        %v1487 = vadd.f32 %v1408, %v1486
        %v1488 = vpop.f32.mrb[0].mxu0
        %1489 = vdwg.mxu0
        %v1490 = vld [vmem:[%s14] sm:$0xff]
        %v1491 = vld [vmem:[%s14 + $0x8] sm:$0xff]
        %v1492 = vsub.f32 %v1482, %v1490
        %v1493 = vsub.f32 %v1487, %v1491
        %v1494 = vld [vmem:[%s15] sm:$0xff]
        %v1495 = vld [vmem:[%s15 + $0x8] sm:$0xff]
        %v1496 = vadd.f32 %v1494, 0.001
        %v1497 = vadd.f32 %v1495, 0.001
        %v1498 = vrsqrt.pop %v1496
        %v1499 = vrsqrt.pop %v1497
        %v1500 = vmul.f32 %v1492, %v1498
        %v1501 = vmul.f32 %v1493, %v1499
        %v1502 = vld [vmem:[%s12] sm:$0xff]
        %v1503 = vld [vmem:[%s12 + $0x8] sm:$0xff]
        %v1504 = vmul.f32 %v1500, %v1502
        %v1505 = vmul.f32 %v1501, %v1503
        %v1506 = vld [vmem:[%s13] sm:$0xff]
        %v1507 = vld [vmem:[%s13 + $0x8] sm:$0xff]
        %v1508 = vadd.f32 %v1504, %v1506
        %v1509 = vadd.f32 %v1505, %v1507
        %v1510 = vmin.f32 %v1508, 20.0
        %v1511 = vmin.f32 %v1509, 20.0
        %v1512 = vmul.f32 %v1510, 1.442695
        %v1513 = vpow.pop %v1512
        %v1514 = vmul.f32 %v1511, 1.442695
        %v1515 = vpow.pop %v1514
        %v1516 = vadd.f32 %v1513, 1.0
        %v1517 = vadd.f32 %v1515, 1.0
        %v1518 = vmul.f32 %v1516, %v1516
        %v1519 = vmul.f32 %v1517, %v1517
        %v1520 = vsub.f32 %v1518, 1.0
        %v1521 = vsub.f32 %v1519, 1.0
        %v1522 = vmul.f32 %v1508, %v1520
        %v1523 = vmul.f32 %v1509, %v1521
        %v1524 = vadd.f32 %v1518, 1.0
        %v1525 = vadd.f32 %v1519, 1.0
        %v1526 = vrcp.pop %v1524
        %v1527 = vmul.f32 %v1522, %v1526
        %v1528 = vrcp.pop %v1525
        %v1529 = vmul.f32 %v1523, %v1528
        %v1530 = vld [vmem:[%s16] sm:$0xff]
        %v1531 = vld [vmem:[%s16 + $0x8] sm:$0xff]
        %v1532 = vld [vmem:[%s17] sm:$0xff]
        %v1533 = vld [vmem:[%s17 + $0x8] sm:$0xff]
        %v1535 = vsel %vm902, %v1530, 0
        %v1538 = vsel %vm902, %v1531, 0
        %1540 = vmatprep.subr.mxu0 0.0
        %1541 = vmatpush1.msra.mxu0 %v1527
        %1542 = vmatprep.subr.mxu0 0.0
        %1543 = vmatpush1.msra.mxu0 %v1529
        %1544 = vmatprep.subr.mxu0 0.0
        %1545 = vmatpush1.msra.mxu0 0.0
        %1546 = vmatprep.subr.mxu0 0.0
        %1547 = vmatpush1.msra.mxu0 0.0
        %1548 = vmatprep.subr.mxu0 0.0
        %1549 = vmatpush1.msra.mxu0 0.0
        %1550 = vmatprep.subr.mxu0 0.0
        %1551 = vmatpush1.msra.mxu0 0.0
        %1552 = vmatprep.subr.mxu0 0.0
        %1553 = vmatpush1.msra.mxu0 0.0
        %1554 = vmatprep.subr.mxu0 0.0
        %1555 = vmatpush1.msra.mxu0 0.0
        %1556 = vmatprep.subr.mxu0 0.0
        %1557 = vmatpush1.msra.mxu0 0.0
        %1558 = vmatprep.subr.mxu0 0.0
        %1559 = vmatpush1.msra.mxu0 0.0
        %1560 = vmatprep.subr.mxu0 0.0
        %1561 = vmatpush1.msra.mxu0 0.0
        %1562 = vmatprep.subr.mxu0 0.0
        %1563 = vmatpush1.msra.mxu0 0.0
        %1564 = vmatprep.subr.mxu0 0.0
        %1565 = vmatpush1.msra.mxu0 0.0
        %1566 = vmatprep.subr.mxu0 0.0
        %1567 = vmatpush1.msra.mxu0 0.0
        %1568 = vmatprep.subr.mxu0 0.0
        %1569 = vmatpush1.msra.mxu0 0.0
        %1570 = vmatprep.subr.mxu0 0.0
        %1571 = vmatpush1.msra.mxu0 0.0
        %1572 = vmatprep.subr.mxu0 0.0
        %1573 = vmatpush1.msra.mxu0 0.0
        %1574 = vmatprep.subr.mxu0 0.0
        %1575 = vmatpush1.msra.mxu0 0.0
        %1576 = vmatprep.subr.mxu0 0.0
        %1577 = vmatpush1.msra.mxu0 0.0
        %1578 = vmatprep.subr.mxu0 0.0
        %1579 = vmatpush1.msra.mxu0 0.0
        %1580 = vmatprep.subr.mxu0 0.0
        %1581 = vmatpush1.msra.mxu0 0.0
        %1582 = vmatprep.subr.mxu0 0.0
        %1583 = vmatpush1.msra.mxu0 0.0
        %1584 = vmatprep.subr.mxu0 0.0
        %1585 = vmatpush1.msra.mxu0 0.0
        %1586 = vmatprep.subr.mxu0 0.0
        %1587 = vmatpush1.msra.mxu0 0.0
        %1588 = vmatprep.subr.mxu0 0.0
        %1589 = vmatpush1.msra.mxu0 0.0
        %1590 = vmatprep.subr.mxu0 0.0
        %1591 = vmatpush1.msra.mxu0 0.0
        %1592 = vmatprep.subr.mxu0 0.0
        %1593 = vmatpush1.msra.mxu0 0.0
        %1594 = vmatprep.subr.mxu0 0.0
        %1595 = vmatpush1.msra.mxu0 0.0
        %1596 = vmatprep.subr.mxu0 0.0
        %1597 = vmatpush1.msra.mxu0 0.0
        %1598 = vmatprep.subr.mxu0 0.0
        %1599 = vmatpush1.msra.mxu0 0.0
        %1600 = vmatprep.subr.mxu0 0.0
        %1601 = vmatpush1.msra.mxu0 0.0
        %1602 = vmatprep.subr.mxu0 0.0
        %1603 = vmatpush1.msra.mxu0 0.0
        %1604 = vmatprep.mubr.f32.mxu0 0.0
        %1605 = vmatmul.mubr.f32.gmra.mrb[0].mxu0 %v1535
        %v1606 = vpop.f32.mrb[0].mxu0
        %v1607 = vadd.f32 %v1532, %v1606
        %v1608 = vpop.f32.mrb[0].mxu0
        %1609 = vmatprep.mubr.f32.mxu0 0.0
        %1610 = vmatmul.mubr.f32.gmra.mrb[0].mxu0 %v1538
        %v1611 = vpop.f32.mrb[0].mxu0
        %v1612 = vadd.f32 %v1533, %v1611
        %v1613 = vpop.f32.mrb[0].mxu0
        %1614 = vdwg.mxu0
        %vm1615 = vcmask 7168
        %v1616 = vsel %vm1615, %v1607, -inf
        %1617 = vmax.xlane.f32.xlu0 %v1616
        %v1618 = vpop.xlane.xlu0 %1617
        %v1619 = vrot.slane %v1618, 4
        %v1620 = vmax.f32 %v1618, %v1619
        %v1621 = vrot.slane %v1620, 2
        %v1622 = vmax.f32 %v1620, %v1621
        %v1623 = vrot.slane %v1622, 1
        %v1624 = vmax.f32 %v1622, %v1623
        %s1625 = vtos %v1624
        %v1626 = vstv %s1625
        %v1627 = vsub.f32 %v1607, %v1626
        %v1628 = vmul.f32 %v1627, 1.442695
        %v1629 = vpow.pop %v1628
        %v1630 = vsel %vm1615, %v1629, 0.0
        %1631 = vadd.xlane.f32.xlu0 %v1630
        %v1632 = vpop.xlane.xlu0 %1631
        %v1633 = vrot.slane %v1632, 4
        %v1634 = vadd.f32 %v1632, %v1633
        %v1635 = vrot.slane %v1634, 2
        %v1636 = vadd.f32 %v1634, %v1635
        %v1637 = vrot.slane %v1636, 1
        %v1638 = vadd.f32 %v1636, %v1637
        %s1639 = vtos %v1638
        %v1640 = vstv %s1639
        %v1641 = vrcp.pop %v1640
        %v1642 = vmul.f32 %v1629, %v1641
        %1644 = vset.pattern.permute.xlu0 0
        %1645 = vperm.xlu0 %1644, %v1642
        %v1646 = vpop.permute.xlu0 %1645
        %v1648 = vmul.f32 %v1646, %v1392
        %v1649 = vmul.f32 %v1646, %v1394
        %v1650 = vadd.f32 %v1648, 0.0
        %v1651 = vadd.f32 %v1649, 0.0
        %v1652 = vsel %vm1615, %v1612, -inf
        %1653 = vmax.xlane.f32.xlu0 %v1652
        %v1654 = vpop.xlane.xlu0 %1653
        %v1655 = vrot.slane %v1654, 4
        %v1656 = vmax.f32 %v1654, %v1655
        %v1657 = vrot.slane %v1656, 2
        %v1658 = vmax.f32 %v1656, %v1657
        %v1659 = vrot.slane %v1658, 1
        %v1660 = vmax.f32 %v1658, %v1659
        %s1661 = vtos %v1660
        %v1662 = vstv %s1661
        %v1663 = vsub.f32 %v1612, %v1662
        %v1664 = vmul.f32 %v1663, 1.442695
        %v1665 = vpow.pop %v1664
        %v1666 = vsel %vm1615, %v1665, 0.0
        %1667 = vadd.xlane.f32.xlu0 %v1666
        %v1668 = vpop.xlane.xlu0 %1667
        %v1669 = vrot.slane %v1668, 4
        %v1670 = vadd.f32 %v1668, %v1669
        %v1671 = vrot.slane %v1670, 2
        %v1672 = vadd.f32 %v1670, %v1671
        %v1673 = vrot.slane %v1672, 1
        %v1674 = vadd.f32 %v1672, %v1673
        %s1675 = vtos %v1674
        %v1676 = vstv %s1675
        %v1677 = vrcp.pop %v1676
        %v1678 = vmul.f32 %v1665, %v1677
        %1680 = vset.pattern.permute.xlu0 0
        %1681 = vperm.xlu0 %1680, %v1678
        %v1682 = vpop.permute.xlu0 %1681
        %v1684 = vmul.f32 %v1682, %v1396
        %v1685 = vmul.f32 %v1682, %v1398
        %v1686 = vadd.f32 %v1650, %v1684
        %v1687 = vadd.f32 %v1651, %v1685
        %1688 = vst [vmem:[%s568] sm:$0xff] %v1686
        %1689 = vst [vmem:[%s568 + $0x8] sm:$0xff] %v1687
        %s1690 = sand.u32 %s423, 1
        %s1691 = scalar_lea.sflag [#allocation3], %s1690
        %s1692 = sand.u32 %s423, 1
        %s1693 = smul.addr %s1692, 16
        %s1694 = scalar_lea.vmem [#allocation2], %s1693
        // Predicated region
        $region93: #{tpu_custom_call.1} parent=91 // pred_check
          %p1695 = pneg %p433
        $region94: #{tpu_custom_call.1} parent=91 // pred_check_branch
          %1697 = sbr.rel (%p1695) target = $region96
        $region95: #{tpu_custom_call.1} parent=91 // pred_region
          %s1699 = ssub.s32 256, 256
          %1700 = vsyncadd %s1691, %s1699
          %s1701 = smul.addr %s32, 2
          %s1702 = smul.addr %s1701, 128
          %s1703 = scalar_lea.hbm %s18, %s1702
          %s1705 = sshll.u32 %s1694, 4
          %s1706 = int_to_ptr.vmem [resolvable:$true] %s1705
          %1708 = dma.vmem_to_hbm [thread:$0]  %s1706, 256, %s1703, %s1691
        $region96: #{tpu_custom_call.1} parent=91 // pred_fallthru
          _
      $region92: #{tpu_custom_call.1} parent=5 // pred_fallthru
        _
      %p1709 = scmp.le.s32.totalorder 2, %s27
      // Predicated region
      $region97: #{tpu_custom_call.1} parent=5 // pred_check
        %p1710 = pneg %p1709
      $region98: #{tpu_custom_call.1} parent=5 // pred_check_branch
        %1712 = sbr.rel (%p1710) target = $region100
      $region99: #{tpu_custom_call.1} parent=5 // pred_region
        %s1713 = ssub.s32 %s27, 2
        // Predicated region
        $region101: #{tpu_custom_call.1} parent=99 // pred_check
          %p1714 = pneg %p439
        $region102: #{tpu_custom_call.1} parent=99 // pred_check_branch
          %1716 = sbr.rel (%p1714) target = $region104
        $region103: #{tpu_custom_call.1} parent=99 // pred_region
          %s1717 = sand.u32 %s424, 1
          %s1718 = scalar_lea.sflag [#allocation3], %s1717
          %s1719 = sand.u32 %s424, 1
          %s1720 = smul.addr %s1719, 16
          %s1721 = scalar_lea.vmem [#allocation2], %s1720
          %1722 = dma.done %s1718, 256
        $region104: #{tpu_custom_call.1} parent=99 // pred_fallthru
          _
      $region100: #{tpu_custom_call.1} parent=5 // pred_fallthru
        _
    $region6: #{tpu_custom_call.1} parent=1 // loop_footer
      %s31 = sadd.s32 1, %s27
    $region7: #{tpu_custom_call.1} parent=1 // loop_footer_branch
      %26 = sbr.rel target = $region3
    $region8: #{tpu_custom_call.1} parent=1 // loop_exit
      _
    %1723 = vsyncpa [#allocation3], 1
    %s1724 = scalar_lea.sflag [#allocation3], 1
    %1725 = vsyncpa %s1724, 1

</llo_original>
